<compile_context>
chip_gen: v5e
topology: v5e:2x2
jax: 0.10.0
libtpu: 0.0.40
codegen_flags: <defaults>
</compile_context>

<pallas_src>
import jax
import jax.numpy as jnp
from jax.experimental import pallas as pl
from jax.experimental.pallas import tpu as pltpu

IN_FEATURES = 768
HIDDEN = 512
NUM_CLASS = 4
OUT_PAD = 128            # lane-dense padded fc2 output width (multiple of 128)
VOCAB = 100
SMALL_BATCH_MAX = 512    # gridless single-call path up to this batch size
BATCH_TILE_MAX = 512     # per-step batch tile cap on the gridded path


def _round_up(x, m):
    return (x + m - 1) // m * m


def fused_head_kernel(summed_ref, invcnt_ref, w1_ref, b1_ref, w2_ref, b2_ref,
                      out_ref):
    """Masked-mean finish + tanh + fc1 + ReLU + fc2 (dropout = identity, eval).

    summed_ref: [TB, 768] bf16   masked token-embedding sums
    invcnt_ref: [TB, 1]   f32    1 / (number of unmasked tokens)
    w1_ref:     [768, 512] bf16      b1_ref: [1, 512] f32
    w2_ref:     [512, 128] bf16 (cols 4..127 zero)   b2_ref: [1, 128] f32
    out_ref:    [TB, 128] bf16 (lane-dense; caller slices [:, :NUM_CLASS])
    """
    # Pooling epilogue (BERT-pooler-like nonlinearity on the masked mean),
    # done in f32 on the VPU/EUP.
    pooled = jnp.tanh(summed_ref[...].astype(jnp.float32) * invcnt_ref[...])

    # fc1 + ReLU: bf16 MXU operands, f32 accumulation + f32 VPU elementwise.
    h = jnp.dot(pooled.astype(jnp.bfloat16), w1_ref[...],
                preferred_element_type=jnp.float32) + b1_ref[...]
    h = jnp.maximum(h, 0.0)

    # fc2 into a lane-dense padded [TB, 128] block, stored as bf16.
    logits = jnp.dot(h.astype(jnp.bfloat16), w2_ref[...],
                     preferred_element_type=jnp.float32) + b2_ref[...]
    out_ref[...] = logits.astype(out_ref.dtype)


def classifier_head(summed, inv_count, params):
    B = summed.shape[0]
    w1, b1 = params["w1"], params["b1"]
    w2p, b2p = params["w2_padded"], params["b2_padded"]

    cost = pl.CostEstimate(
        flops=2 * B * (IN_FEATURES * HIDDEN + HIDDEN * OUT_PAD),
        transcendentals=B * IN_FEATURES,
        bytes_accessed=(summed.size * summed.dtype.itemsize
                        + inv_count.size * 4
                        + w1.size * 2 + b1.size * 4
                        + w2p.size * 2 + b2p.size * 4
                        + B * OUT_PAD * 2),
    )

    if B <= SMALL_BATCH_MAX:
        # Small/medium batch: single gridless call; whole operands are VMEM
        # blocks (<= ~0.75 MiB bf16 input + ~0.9 MiB bf16 weights), weights
        # loaded once, no per-grid-step overhead.
        out = pl.pallas_call(
            fused_head_kernel,
            out_shape=jax.ShapeDtypeStruct((B, OUT_PAD), jnp.bfloat16),
            cost_estimate=cost,
        )(summed, inv_count, w1, b1, w2p, b2p)
    else:
        # Large batch: tile the batch with a ragged-tolerant cdiv grid (no
        # jnp.pad round-trip). Tile is chosen so there are always >= 2 steps
        # (both TensorCores on v7x) but capped at 512 rows so per-step VMEM
        # (bf16 x-tile 0.75 MiB x2 + bf16 out 0.125 MiB x2 + ~0.9 MiB weights
        # + f32 temporaries ≈ 8 MiB) stays under even v5e's 16 MiB scoped
        # default.  Weights map to block (0,0) every step -> VMEM-resident.
        tile = min(BATCH_TILE_MAX, _round_up(pl.cdiv(B, 2), 16))
        out = pl.pallas_call(
            fused_head_kernel,
            out_shape=jax.ShapeDtypeStruct((B, OUT_PAD), jnp.bfloat16),
            grid=(pl.cdiv(B, tile),),
            in_specs=[
                pl.BlockSpec((tile, IN_FEATURES), lambda i: (i, 0)),
                pl.BlockSpec((tile, 1), lambda i: (i, 0)),
                pl.BlockSpec((IN_FEATURES, HIDDEN), lambda i: (0, 0)),
                pl.BlockSpec((1, HIDDEN), lambda i: (0, 0)),
                pl.BlockSpec((HIDDEN, OUT_PAD), lambda i: (0, 0)),
                pl.BlockSpec((1, OUT_PAD), lambda i: (0, 0)),
            ],
            out_specs=pl.BlockSpec((tile, OUT_PAD), lambda i: (i, 0)),
            compiler_params=pltpu.CompilerParams(
                dimension_semantics=("parallel",)),
            cost_estimate=cost,
        )(summed, inv_count, w1, b1, w2p, b2p)

    # Slice the 4 real classes out of the lane-dense padded block; upcast.
    return out[:, :NUM_CLASS].astype(jnp.float32)


def bert_pooled_sums(sentences_id, attention_mask, emb_table):
    """Pre-pooling glue for the BERT stand-in (plain-JAX gather + masked sum).

    Returns masked embedding sums [B, 768] (bf16, the dominant HBM stream) and
    inverse token counts [B, 1] (f32); the mean + tanh epilogue is fused into
    the Pallas head kernel.
    """
    # TODO(synk): the pretrained `bert` encoder has no clean Pallas equivalent;
    # this deterministic masked-mean-pool embedding stub produces the [B, 768]
    # pooled features the classifier head consumes.
    # TODO(synk): longer-term, fuse this gather+masked-sum into the Pallas
    # kernel (scalar-prefetch token ids, DMA-gather embedding rows) so the
    # [B, 768] pooled-sum tensor never round-trips HBM.
    emb = emb_table[sentences_id]                                # [B, S, 768]
    mask = attention_mask.astype(jnp.float32)[..., None]         # [B, S, 1]
    summed = jnp.sum(emb * mask, axis=1).astype(jnp.bfloat16)    # [B, 768]
    inv_count = 1.0 / jnp.maximum(jnp.sum(mask, axis=1), 1.0)    # [B, 1]
    return summed, inv_count


def classifier_model_forward(sentences_id, attention_mask, params):
    summed, inv_count = bert_pooled_sums(sentences_id, attention_mask,
                                         params["emb"])
    # drop_out(pooled_out) and drop_out(relu(fc1(x))) are identity in eval mode.
    return classifier_head(summed, inv_count, params)


def init_params(key):
    """f32 parameters with PyTorch Linear default init, weights pre-transposed
    to [in_features, out_features]."""
    k_emb, k_w1, k_b1, k_w2, k_b2 = jax.random.split(key, 5)
    emb = jax.random.normal(k_emb, (VOCAB, IN_FEATURES), jnp.float32) * 0.02
    bound1 = 1.0 / (IN_FEATURES ** 0.5)
    bound2 = 1.0 / (HIDDEN ** 0.5)
    w1 = jax.random.uniform(k_w1, (IN_FEATURES, HIDDEN), jnp.float32, -bound1, bound1)
    b1 = jax.random.uniform(k_b1, (1, HIDDEN), jnp.float32, -bound1, bound1)
    w2 = jax.random.uniform(k_w2, (HIDDEN, NUM_CLASS), jnp.float32, -bound2, bound2)
    b2 = jax.random.uniform(k_b2, (1, NUM_CLASS), jnp.float32, -bound2, bound2)
    return {"emb": emb, "w1": w1, "b1": b1, "w2": w2, "b2": b2}


def pack_params(raw):
    """Kernel-ready parameters: bf16 MXU weights + lane-dense padded fc2."""
    w2p = jnp.zeros((HIDDEN, OUT_PAD), jnp.float32).at[:, :NUM_CLASS].set(raw["w2"])
    b2p = jnp.zeros((1, OUT_PAD), jnp.float32).at[:, :NUM_CLASS].set(raw["b2"])
    return {
        "emb": raw["emb"],
        "w1": raw["w1"].astype(jnp.bfloat16),
        "b1": raw["b1"],
        "w2_padded": w2p.astype(jnp.bfloat16),
        "b2_padded": b2p,
    }


if __name__ == "__main__":
    key = jax.random.PRNGKey(0)
    k_params, k_ids, k_mask = jax.random.split(key, 3)

    B, S = 8, 16  # small batch, short sequences
    raw = init_params(k_params)
    params = pack_params(raw)
    sentences_id = jax.random.randint(k_ids, (B, S), 0, VOCAB, dtype=jnp.int32)
    attention_mask = (jax.random.uniform(k_mask, (B, S)) > 0.2).astype(jnp.int32)

    logits = classifier_model_forward(sentences_id, attention_mask, params)
    jax.block_until_ready(logits)
    assert logits.shape == (B, NUM_CLASS)

    # --- Reference 1: mirrors the kernel's bf16/pad math exactly (tight). ---
    summed_bf16, inv_count = bert_pooled_sums(sentences_id, attention_mask,
                                              params["emb"])
    pooled = jnp.tanh(summed_bf16.astype(jnp.float32) * inv_count)
    h = jnp.dot(pooled.astype(jnp.bfloat16), params["w1"],
                preferred_element_type=jnp.float32) + params["b1"]
    h = jnp.maximum(h, 0.0)
    ref_bf16 = (jnp.dot(h.astype(jnp.bfloat16), params["w2_padded"],
                        preferred_element_type=jnp.float32)
                + params["b2_padded"]).astype(jnp.bfloat16)
    ref_bf16 = ref_bf16[:, :NUM_CLASS].astype(jnp.float32)
    assert jnp.allclose(logits, ref_bf16, atol=2e-3, rtol=2e-3)

    # --- Reference 2: full-f32 PyTorch forward semantics (loose, bf16 error). --
    emb = params["emb"][sentences_id]
    mask = attention_mask.astype(jnp.float32)[..., None]
    summed_f32 = jnp.sum(emb * mask, axis=1)
    pooled_f32 = jnp.tanh(summed_f32 * inv_count)
    ref_f32 = (jnp.maximum(pooled_f32 @ raw["w1"] + raw["b1"], 0.0)
               @ raw["w2"] + raw["b2"])
    assert jnp.allclose(logits, ref_f32, atol=2e-2, rtol=2e-2)

    print("KERNEL_OK")
</pallas_src>

<mosaic_0001>
module attributes {stable_mosaic.version = 11 : i64} {
  func.func @fused_head_kernel(%arg0: memref<8x768xbf16, #tpu.memory_space<vmem>>, %arg1: memref<8x1xf32, #tpu.memory_space<vmem>>, %arg2: memref<768x512xbf16, #tpu.memory_space<vmem>>, %arg3: memref<1x512xf32, #tpu.memory_space<vmem>>, %arg4: memref<512x128xbf16, #tpu.memory_space<vmem>>, %arg5: memref<1x128xf32, #tpu.memory_space<vmem>>, %arg6: memref<8x128xbf16, #tpu.memory_space<vmem>>) attributes {dimension_semantics = [], scalar_prefetch = 0 : i64, scratch_operands = 0 : i64, tpu.core_type = #tpu.core_type<tc>} {
    %c0 = arith.constant 0 : index
    %c0_0 = arith.constant 0 : index
    %0 = vector.load %arg0[%c0, %c0_0] : memref<8x768xbf16, #tpu.memory_space<vmem>>, vector<8x768xbf16>
    %1 = arith.extf %0 : vector<8x768xbf16> to vector<8x768xf32>
    %c0_1 = arith.constant 0 : index
    %c0_2 = arith.constant 0 : index
    %2 = vector.load %arg1[%c0_1, %c0_2] : memref<8x1xf32, #tpu.memory_space<vmem>>, vector<8x1xf32>
    %3 = vector.broadcast %2 : vector<8x1xf32> to vector<8x768xf32>
    %4 = arith.mulf %1, %3 : vector<8x768xf32>
    %5 = math.tanh %4 : vector<8x768xf32>
    %6 = arith.truncf %5 : vector<8x768xf32> to vector<8x768xbf16>
    %c0_3 = arith.constant 0 : index
    %c0_4 = arith.constant 0 : index
    %7 = vector.load %arg2[%c0_3, %c0_4] : memref<768x512xbf16, #tpu.memory_space<vmem>>, vector<768x512xbf16>
    %cst = arith.constant dense<0.000000e+00> : vector<8x512xf32>
    %8 = tpu.matmul %6, %7, %cst {dimension_numbers = #tpu.dot_dimension_numbers<[1], [0], [0], [1], [0, 0, 1, 1], [], []>} : vector<8x768xbf16>, vector<768x512xbf16>, vector<8x512xf32> -> vector<8x512xf32>
    %c0_5 = arith.constant 0 : index
    %c0_6 = arith.constant 0 : index
    %9 = vector.load %arg3[%c0_5, %c0_6] : memref<1x512xf32, #tpu.memory_space<vmem>>, vector<1x512xf32>
    %10 = vector.broadcast %9 : vector<1x512xf32> to vector<8x512xf32>
    %11 = arith.addf %8, %10 : vector<8x512xf32>
    %cst_7 = arith.constant 0.000000e+00 : f32
    %12 = vector.broadcast %cst_7 : f32 to vector<8x512xf32>
    %13 = arith.maximumf %11, %12 : vector<8x512xf32>
    %14 = arith.truncf %13 : vector<8x512xf32> to vector<8x512xbf16>
    %c0_8 = arith.constant 0 : index
    %c0_9 = arith.constant 0 : index
    %15 = vector.load %arg4[%c0_8, %c0_9] : memref<512x128xbf16, #tpu.memory_space<vmem>>, vector<512x128xbf16>
    %cst_10 = arith.constant dense<0.000000e+00> : vector<8x128xf32>
    %16 = tpu.matmul %14, %15, %cst_10 {dimension_numbers = #tpu.dot_dimension_numbers<[1], [0], [0], [1], [0, 0, 1, 1], [], []>} : vector<8x512xbf16>, vector<512x128xbf16>, vector<8x128xf32> -> vector<8x128xf32>
    %c0_11 = arith.constant 0 : index
    %c0_12 = arith.constant 0 : index
    %17 = vector.load %arg5[%c0_11, %c0_12] : memref<1x128xf32, #tpu.memory_space<vmem>>, vector<1x128xf32>
    %18 = vector.broadcast %17 : vector<1x128xf32> to vector<8x128xf32>
    %19 = arith.addf %16, %18 : vector<8x128xf32>
    %20 = arith.truncf %19 : vector<8x128xf32> to vector<8x128xbf16>
    %c0_13 = arith.constant 0 : index
    %c0_14 = arith.constant 0 : index
    %21 = vector.load %arg6[%c0_13, %c0_14] : memref<8x128xbf16, #tpu.memory_space<vmem>>, vector<8x128xbf16>
    tpu.vector_store %arg6[%c0_13, %c0_14], %20 {strides = array<i32>} : memref<8x128xbf16, #tpu.memory_space<vmem>>, vector<8x128xbf16>,
    return
  }
}

</mosaic_0001>

<llo_original>
// kernel: tpu_custom_call.1
$region0: #{tpu_custom_call.1}
  #allocation0 [shape = 'u32[]', space=smem, size = 0x4, offset = 0x4, fixed_abs, tag = 'smem constant byte address 0x4 - core index']
  #allocation1 [shape = 'u32[72,128]{1,0:T(1,128)}', space=vmem, size = 0x9000, scoped, tag = 'internal scratch']
  %s0 = inlined_call_operand.hbm [shape: bf16[8,768], index: 0, kind: input, shape index: {}]
  %s1 = inlined_call_operand.vmem [shape: f32[8,1], index: 1, kind: input, shape index: {}]
  %s2 = inlined_call_operand.hbm [shape: bf16[768,512], index: 2, kind: input, shape index: {}]
  %s3 = inlined_call_operand.vmem [shape: f32[1,512], index: 3, kind: input, shape index: {}]
  %s4 = inlined_call_operand.hbm [shape: bf16[512,128], index: 4, kind: input, shape index: {}]
  %s5 = inlined_call_operand.vmem [shape: f32[1,128], index: 5, kind: input, shape index: {}]
  %s6 = inlined_call_operand.hbm [shape: bf16[8,128], index: 6, kind: output, shape index: {}]
  %s7 = sld [smem:[#allocation0]]
  $region46: #{tpu_custom_call.1} parent=0
    _
  %s9 = ssub.s32 1, %s7
  %s10 = scalar_select 0, %s9, %s7
  $region1: #{tpu_custom_call.1} parent=0
    #allocation2 [shape = 'u8[12288]{0}', space=vmem, size = 0x3000, scoped, tag = 'input window, operand 0, single buffered']
    #allocation3 [shape = 's32[1]{0}', space=sflag, size = 0x4, scoped, tag = 'scoped memory for tpu_custom_call.1']
    #allocation4 [shape = 's32[1]{0}', space=sflag, size = 0x4, scoped, tag = 'scoped memory for tpu_custom_call.1']
    #allocation5 [shape = 'u8[786432]{0}', space=vmem, size = 0xc0000, scoped, tag = 'input window, operand 2, single buffered']
    #allocation6 [shape = 's32[1]{0}', space=sflag, size = 0x4, scoped, tag = 'scoped memory for tpu_custom_call.1']
    #allocation7 [shape = 'u8[131072]{0}', space=vmem, size = 0x20000, scoped, tag = 'input window, operand 4, single buffered']
    #allocation8 [shape = 'u8[2048]{0}', space=vmem, size = 0x800, scoped, tag = 'output window, operand 0, single buffered']
    %11 = vsyncpa [#allocation3], 0
    %12 = vsyncpa [#allocation6], 0
    %13 = vsyncpa [#allocation4], 0
    // Predicated region
    $region2: #{tpu_custom_call.1} parent=1 // pred_check
      _
    $region3: #{tpu_custom_call.1} parent=1 // pred_check_branch
      %15 = sbr.rel (0) target = $region5
    $region4: #{tpu_custom_call.1} parent=1 // pred_region
      %17 = vsyncadd [#allocation3], 0
      %s19 = sshll.u32 %s0, 4
      %s20 = int_to_ptr.hbm [resolvable:$true] %s19
      %s21 = sshll.u32 [#allocation2], 4
      %s22 = int_to_ptr.vmem [resolvable:$true] %s21
      %24 = dma.hbm_to_vmem [thread:$0]  %s20, 384, %s22, [#allocation3]
    $region5: #{tpu_custom_call.1} parent=1 // pred_fallthru
      _
    // Predicated region
    $region6: #{tpu_custom_call.1} parent=1 // pred_check
      _
    $region7: #{tpu_custom_call.1} parent=1 // pred_check_branch
      %26 = sbr.rel (0) target = $region9
    $region8: #{tpu_custom_call.1} parent=1 // pred_region
      _
    $region9: #{tpu_custom_call.1} parent=1 // pred_fallthru
      _
    // Predicated region
    $region10: #{tpu_custom_call.1} parent=1 // pred_check
      _
    $region11: #{tpu_custom_call.1} parent=1 // pred_check_branch
      %28 = sbr.rel (0) target = $region13
    $region12: #{tpu_custom_call.1} parent=1 // pred_region
      %30 = vsyncadd [#allocation6], 0
      %s31 = sshll.u32 %s2, 4
      %s32 = int_to_ptr.hbm [resolvable:$true] %s31
      %s33 = sshll.u32 [#allocation5], 4
      %s34 = int_to_ptr.vmem [resolvable:$true] %s33
      %39 = dma.hbm_to_vmem [thread:$0]  %s32, 24576, %s34, [#allocation6], 256, 256, 16
    $region13: #{tpu_custom_call.1} parent=1 // pred_fallthru
      _
    // Predicated region
    $region14: #{tpu_custom_call.1} parent=1 // pred_check
      _
    $region15: #{tpu_custom_call.1} parent=1 // pred_check_branch
      %41 = sbr.rel (0) target = $region17
    $region16: #{tpu_custom_call.1} parent=1 // pred_region
      _
    $region17: #{tpu_custom_call.1} parent=1 // pred_fallthru
      _
    // Predicated region
    $region18: #{tpu_custom_call.1} parent=1 // pred_check
      _
    $region19: #{tpu_custom_call.1} parent=1 // pred_check_branch
      %43 = sbr.rel (0) target = $region21
    $region20: #{tpu_custom_call.1} parent=1 // pred_region
      %45 = vsyncadd [#allocation6], 0
      %s46 = sshll.u32 %s4, 4
      %s47 = int_to_ptr.hbm [resolvable:$true] %s46
      %s48 = sshll.u32 [#allocation7], 4
      %s49 = int_to_ptr.vmem [resolvable:$true] %s48
      %54 = dma.hbm_to_vmem [thread:$0]  %s47, 4096, %s49, [#allocation6], 64, 64, 4
    $region21: #{tpu_custom_call.1} parent=1 // pred_fallthru
      _
    // Predicated region
    $region22: #{tpu_custom_call.1} parent=1 // pred_check
      _
    $region23: #{tpu_custom_call.1} parent=1 // pred_check_branch
      %56 = sbr.rel (0) target = $region25
    $region24: #{tpu_custom_call.1} parent=1 // pred_region
      _
    $region25: #{tpu_custom_call.1} parent=1 // pred_fallthru
      _
    // Predicated region
    $region26: #{tpu_custom_call.1} parent=1 // pred_check
      _
    $region27: #{tpu_custom_call.1} parent=1 // pred_check_branch
      %58 = sbr.rel (0) target = $region29
    $region28: #{tpu_custom_call.1} parent=1 // pred_region
      %60 = dma.done [#allocation3], 384
    $region29: #{tpu_custom_call.1} parent=1 // pred_fallthru
      _
    // Predicated region
    $region30: #{tpu_custom_call.1} parent=1 // pred_check
      _
    $region31: #{tpu_custom_call.1} parent=1 // pred_check_branch
      %62 = sbr.rel (0) target = $region33
    $region32: #{tpu_custom_call.1} parent=1 // pred_region
      %64 = dma.done [#allocation6], 24576
    $region33: #{tpu_custom_call.1} parent=1 // pred_fallthru
      _
    // Predicated region
    $region34: #{tpu_custom_call.1} parent=1 // pred_check
      _
    $region35: #{tpu_custom_call.1} parent=1 // pred_check_branch
      %66 = sbr.rel (0) target = $region37
    $region36: #{tpu_custom_call.1} parent=1 // pred_region
      %68 = dma.done [#allocation6], 4096
    $region37: #{tpu_custom_call.1} parent=1 // pred_fallthru
      _
    %v69 = vld [vmem:[#allocation2] sm:$0xff]
    %v70 = vld [vmem:[#allocation2 + $0x8] sm:$0xff]
    %v71 = vld [vmem:[#allocation2 + $0x10] sm:$0xff]
    %v72 = vunpack.c.l.bf16 %v69
    %v73 = vunpack.c.h.bf16 %v69
    %v74 = vunpack.c.l.bf16 %v70
    %v75 = vunpack.c.h.bf16 %v70
    %v76 = vunpack.c.l.bf16 %v71
    %v77 = vunpack.c.h.bf16 %v71
    %v78 = vld [vmem:[%s1] sm:$0xff]
    %80 = vset.pattern.permute.xlu0 0
    %81 = vperm.xlu0 %80, %v78
    %v82 = vpop.permute.xlu0 %81
    %v84 = vmul.f32 %v72, %v82
    %v85 = vmul.f32 %v73, %v82
    %v86 = vmul.f32 %v74, %v82
    %v87 = vmul.f32 %v75, %v82
    %v88 = vmul.f32 %v76, %v82
    %v89 = vmul.f32 %v77, %v82
    %v90 = vtanh.pop %v84
    %v91 = vtanh.pop %v85
    %v92 = vtanh.pop %v86
    %v93 = vtanh.pop %v87
    %v94 = vtanh.pop %v88
    %v95 = vtanh.pop %v89
    %v96 = vpack.c.bf16 %v90, %v90
    %v97 = vpack.c.bf16 %v91, %v91
    %v98 = vpack.c.bf16 %v92, %v92
    %v99 = vpack.c.bf16 %v93, %v93
    %v100 = vpack.c.bf16 %v94, %v94
    %v101 = vpack.c.bf16 %v95, %v95
    %v102 = vld [vmem:[#allocation5] sm:$0xff]
    %v103 = vld [vmem:[#allocation5 + $0x8] sm:$0xff]
    %v104 = vld [vmem:[#allocation5 + $0x10] sm:$0xff]
    %v105 = vld [vmem:[#allocation5 + $0x18] sm:$0xff]
    %v106 = vld [vmem:[#allocation5 + $0x20] sm:$0xff]
    %v107 = vld [vmem:[#allocation5 + $0x28] sm:$0xff]
    %v108 = vld [vmem:[#allocation5 + $0x30] sm:$0xff]
    %v109 = vld [vmem:[#allocation5 + $0x38] sm:$0xff]
    %v110 = vld [vmem:[#allocation5 + $0x40] sm:$0xff]
    %v111 = vld [vmem:[#allocation5 + $0x48] sm:$0xff]
    %v112 = vld [vmem:[#allocation5 + $0x50] sm:$0xff]
    %v113 = vld [vmem:[#allocation5 + $0x58] sm:$0xff]
    %v114 = vld [vmem:[#allocation5 + $0x60] sm:$0xff]
    %v115 = vld [vmem:[#allocation5 + $0x68] sm:$0xff]
    %v116 = vld [vmem:[#allocation5 + $0x70] sm:$0xff]
    %v117 = vld [vmem:[#allocation5 + $0x78] sm:$0xff]
    %v118 = vld [vmem:[#allocation5 + $0x80] sm:$0xff]
    %v119 = vld [vmem:[#allocation5 + $0x88] sm:$0xff]
    %v120 = vld [vmem:[#allocation5 + $0x90] sm:$0xff]
    %v121 = vld [vmem:[#allocation5 + $0x98] sm:$0xff]
    %v122 = vld [vmem:[#allocation5 + $0xa0] sm:$0xff]
    %v123 = vld [vmem:[#allocation5 + $0xa8] sm:$0xff]
    %v124 = vld [vmem:[#allocation5 + $0xb0] sm:$0xff]
    %v125 = vld [vmem:[#allocation5 + $0xb8] sm:$0xff]
    %v126 = vld [vmem:[#allocation5 + $0xc0] sm:$0xff]
    %v127 = vld [vmem:[#allocation5 + $0xc8] sm:$0xff]
    %v128 = vld [vmem:[#allocation5 + $0xd0] sm:$0xff]
    %v129 = vld [vmem:[#allocation5 + $0xd8] sm:$0xff]
    %v130 = vld [vmem:[#allocation5 + $0xe0] sm:$0xff]
    %v131 = vld [vmem:[#allocation5 + $0xe8] sm:$0xff]
    %v132 = vld [vmem:[#allocation5 + $0xf0] sm:$0xff]
    %v133 = vld [vmem:[#allocation5 + $0xf8] sm:$0xff]
    %v134 = vld [vmem:[#allocation5 + $0x100] sm:$0xff]
    %v135 = vld [vmem:[#allocation5 + $0x108] sm:$0xff]
    %v136 = vld [vmem:[#allocation5 + $0x110] sm:$0xff]
    %v137 = vld [vmem:[#allocation5 + $0x118] sm:$0xff]
    %v138 = vld [vmem:[#allocation5 + $0x120] sm:$0xff]
    %v139 = vld [vmem:[#allocation5 + $0x128] sm:$0xff]
    %v140 = vld [vmem:[#allocation5 + $0x130] sm:$0xff]
    %v141 = vld [vmem:[#allocation5 + $0x138] sm:$0xff]
    %v142 = vld [vmem:[#allocation5 + $0x140] sm:$0xff]
    %v143 = vld [vmem:[#allocation5 + $0x148] sm:$0xff]
    %v144 = vld [vmem:[#allocation5 + $0x150] sm:$0xff]
    %v145 = vld [vmem:[#allocation5 + $0x158] sm:$0xff]
    %v146 = vld [vmem:[#allocation5 + $0x160] sm:$0xff]
    %v147 = vld [vmem:[#allocation5 + $0x168] sm:$0xff]
    %v148 = vld [vmem:[#allocation5 + $0x170] sm:$0xff]
    %v149 = vld [vmem:[#allocation5 + $0x178] sm:$0xff]
    %v150 = vld [vmem:[#allocation5 + $0x180] sm:$0xff]
    %v151 = vld [vmem:[#allocation5 + $0x188] sm:$0xff]
    %v152 = vld [vmem:[#allocation5 + $0x190] sm:$0xff]
    %v153 = vld [vmem:[#allocation5 + $0x198] sm:$0xff]
    %v154 = vld [vmem:[#allocation5 + $0x1a0] sm:$0xff]
    %v155 = vld [vmem:[#allocation5 + $0x1a8] sm:$0xff]
    %v156 = vld [vmem:[#allocation5 + $0x1b0] sm:$0xff]
    %v157 = vld [vmem:[#allocation5 + $0x1b8] sm:$0xff]
    %v158 = vld [vmem:[#allocation5 + $0x1c0] sm:$0xff]
    %v159 = vld [vmem:[#allocation5 + $0x1c8] sm:$0xff]
    %v160 = vld [vmem:[#allocation5 + $0x1d0] sm:$0xff]
    %v161 = vld [vmem:[#allocation5 + $0x1d8] sm:$0xff]
    %v162 = vld [vmem:[#allocation5 + $0x1e0] sm:$0xff]
    %v163 = vld [vmem:[#allocation5 + $0x1e8] sm:$0xff]
    %v164 = vld [vmem:[#allocation5 + $0x1f0] sm:$0xff]
    %v165 = vld [vmem:[#allocation5 + $0x1f8] sm:$0xff]
    %v166 = vld [vmem:[#allocation5 + $0x200] sm:$0xff]
    %v167 = vld [vmem:[#allocation5 + $0x208] sm:$0xff]
    %v168 = vld [vmem:[#allocation5 + $0x210] sm:$0xff]
    %v169 = vld [vmem:[#allocation5 + $0x218] sm:$0xff]
    %v170 = vld [vmem:[#allocation5 + $0x220] sm:$0xff]
    %v171 = vld [vmem:[#allocation5 + $0x228] sm:$0xff]
    %v172 = vld [vmem:[#allocation5 + $0x230] sm:$0xff]
    %v173 = vld [vmem:[#allocation5 + $0x238] sm:$0xff]
    %v174 = vld [vmem:[#allocation5 + $0x240] sm:$0xff]
    %v175 = vld [vmem:[#allocation5 + $0x248] sm:$0xff]
    %v176 = vld [vmem:[#allocation5 + $0x250] sm:$0xff]
    %v177 = vld [vmem:[#allocation5 + $0x258] sm:$0xff]
    %v178 = vld [vmem:[#allocation5 + $0x260] sm:$0xff]
    %v179 = vld [vmem:[#allocation5 + $0x268] sm:$0xff]
    %v180 = vld [vmem:[#allocation5 + $0x270] sm:$0xff]
    %v181 = vld [vmem:[#allocation5 + $0x278] sm:$0xff]
    %v182 = vld [vmem:[#allocation5 + $0x280] sm:$0xff]
    %v183 = vld [vmem:[#allocation5 + $0x288] sm:$0xff]
    %v184 = vld [vmem:[#allocation5 + $0x290] sm:$0xff]
    %v185 = vld [vmem:[#allocation5 + $0x298] sm:$0xff]
    %v186 = vld [vmem:[#allocation5 + $0x2a0] sm:$0xff]
    %v187 = vld [vmem:[#allocation5 + $0x2a8] sm:$0xff]
    %v188 = vld [vmem:[#allocation5 + $0x2b0] sm:$0xff]
    %v189 = vld [vmem:[#allocation5 + $0x2b8] sm:$0xff]
    %v190 = vld [vmem:[#allocation5 + $0x2c0] sm:$0xff]
    %v191 = vld [vmem:[#allocation5 + $0x2c8] sm:$0xff]
    %v192 = vld [vmem:[#allocation5 + $0x2d0] sm:$0xff]
    %v193 = vld [vmem:[#allocation5 + $0x2d8] sm:$0xff]
    %v194 = vld [vmem:[#allocation5 + $0x2e0] sm:$0xff]
    %v195 = vld [vmem:[#allocation5 + $0x2e8] sm:$0xff]
    %v196 = vld [vmem:[#allocation5 + $0x2f0] sm:$0xff]
    %v197 = vld [vmem:[#allocation5 + $0x2f8] sm:$0xff]
    %v198 = vld [vmem:[#allocation5 + $0x300] sm:$0xff]
    %v199 = vld [vmem:[#allocation5 + $0x308] sm:$0xff]
    %v200 = vld [vmem:[#allocation5 + $0x310] sm:$0xff]
    %v201 = vld [vmem:[#allocation5 + $0x318] sm:$0xff]
    %v202 = vld [vmem:[#allocation5 + $0x320] sm:$0xff]
    %v203 = vld [vmem:[#allocation5 + $0x328] sm:$0xff]
    %v204 = vld [vmem:[#allocation5 + $0x330] sm:$0xff]
    %v205 = vld [vmem:[#allocation5 + $0x338] sm:$0xff]
    %v206 = vld [vmem:[#allocation5 + $0x340] sm:$0xff]
    %v207 = vld [vmem:[#allocation5 + $0x348] sm:$0xff]
    %v208 = vld [vmem:[#allocation5 + $0x350] sm:$0xff]
    %v209 = vld [vmem:[#allocation5 + $0x358] sm:$0xff]
    %v210 = vld [vmem:[#allocation5 + $0x360] sm:$0xff]
    %v211 = vld [vmem:[#allocation5 + $0x368] sm:$0xff]
    %v212 = vld [vmem:[#allocation5 + $0x370] sm:$0xff]
    %v213 = vld [vmem:[#allocation5 + $0x378] sm:$0xff]
    %v214 = vld [vmem:[#allocation5 + $0x380] sm:$0xff]
    %v215 = vld [vmem:[#allocation5 + $0x388] sm:$0xff]
    %v216 = vld [vmem:[#allocation5 + $0x390] sm:$0xff]
    %v217 = vld [vmem:[#allocation5 + $0x398] sm:$0xff]
    %v218 = vld [vmem:[#allocation5 + $0x3a0] sm:$0xff]
    %v219 = vld [vmem:[#allocation5 + $0x3a8] sm:$0xff]
    %v220 = vld [vmem:[#allocation5 + $0x3b0] sm:$0xff]
    %v221 = vld [vmem:[#allocation5 + $0x3b8] sm:$0xff]
    %v222 = vld [vmem:[#allocation5 + $0x3c0] sm:$0xff]
    %v223 = vld [vmem:[#allocation5 + $0x3c8] sm:$0xff]
    %v224 = vld [vmem:[#allocation5 + $0x3d0] sm:$0xff]
    %v225 = vld [vmem:[#allocation5 + $0x3d8] sm:$0xff]
    %v226 = vld [vmem:[#allocation5 + $0x3e0] sm:$0xff]
    %v227 = vld [vmem:[#allocation5 + $0x3e8] sm:$0xff]
    %v228 = vld [vmem:[#allocation5 + $0x3f0] sm:$0xff]
    %v229 = vld [vmem:[#allocation5 + $0x3f8] sm:$0xff]
    %v230 = vld [vmem:[#allocation5 + $0x400] sm:$0xff]
    %v231 = vld [vmem:[#allocation5 + $0x408] sm:$0xff]
    %v232 = vld [vmem:[#allocation5 + $0x410] sm:$0xff]
    %v233 = vld [vmem:[#allocation5 + $0x418] sm:$0xff]
    %v234 = vld [vmem:[#allocation5 + $0x420] sm:$0xff]
    %v235 = vld [vmem:[#allocation5 + $0x428] sm:$0xff]
    %v236 = vld [vmem:[#allocation5 + $0x430] sm:$0xff]
    %v237 = vld [vmem:[#allocation5 + $0x438] sm:$0xff]
    %v238 = vld [vmem:[#allocation5 + $0x440] sm:$0xff]
    %v239 = vld [vmem:[#allocation5 + $0x448] sm:$0xff]
    %v240 = vld [vmem:[#allocation5 + $0x450] sm:$0xff]
    %v241 = vld [vmem:[#allocation5 + $0x458] sm:$0xff]
    %v242 = vld [vmem:[#allocation5 + $0x460] sm:$0xff]
    %v243 = vld [vmem:[#allocation5 + $0x468] sm:$0xff]
    %v244 = vld [vmem:[#allocation5 + $0x470] sm:$0xff]
    %v245 = vld [vmem:[#allocation5 + $0x478] sm:$0xff]
    %v246 = vld [vmem:[#allocation5 + $0x480] sm:$0xff]
    %v247 = vld [vmem:[#allocation5 + $0x488] sm:$0xff]
    %v248 = vld [vmem:[#allocation5 + $0x490] sm:$0xff]
    %v249 = vld [vmem:[#allocation5 + $0x498] sm:$0xff]
    %v250 = vld [vmem:[#allocation5 + $0x4a0] sm:$0xff]
    %v251 = vld [vmem:[#allocation5 + $0x4a8] sm:$0xff]
    %v252 = vld [vmem:[#allocation5 + $0x4b0] sm:$0xff]
    %v253 = vld [vmem:[#allocation5 + $0x4b8] sm:$0xff]
    %v254 = vld [vmem:[#allocation5 + $0x4c0] sm:$0xff]
    %v255 = vld [vmem:[#allocation5 + $0x4c8] sm:$0xff]
    %v256 = vld [vmem:[#allocation5 + $0x4d0] sm:$0xff]
    %v257 = vld [vmem:[#allocation5 + $0x4d8] sm:$0xff]
    %v258 = vld [vmem:[#allocation5 + $0x4e0] sm:$0xff]
    %v259 = vld [vmem:[#allocation5 + $0x4e8] sm:$0xff]
    %v260 = vld [vmem:[#allocation5 + $0x4f0] sm:$0xff]
    %v261 = vld [vmem:[#allocation5 + $0x4f8] sm:$0xff]
    %v262 = vld [vmem:[#allocation5 + $0x500] sm:$0xff]
    %v263 = vld [vmem:[#allocation5 + $0x508] sm:$0xff]
    %v264 = vld [vmem:[#allocation5 + $0x510] sm:$0xff]
    %v265 = vld [vmem:[#allocation5 + $0x518] sm:$0xff]
    %v266 = vld [vmem:[#allocation5 + $0x520] sm:$0xff]
    %v267 = vld [vmem:[#allocation5 + $0x528] sm:$0xff]
    %v268 = vld [vmem:[#allocation5 + $0x530] sm:$0xff]
    %v269 = vld [vmem:[#allocation5 + $0x538] sm:$0xff]
    %v270 = vld [vmem:[#allocation5 + $0x540] sm:$0xff]
    %v271 = vld [vmem:[#allocation5 + $0x548] sm:$0xff]
    %v272 = vld [vmem:[#allocation5 + $0x550] sm:$0xff]
    %v273 = vld [vmem:[#allocation5 + $0x558] sm:$0xff]
    %v274 = vld [vmem:[#allocation5 + $0x560] sm:$0xff]
    %v275 = vld [vmem:[#allocation5 + $0x568] sm:$0xff]
    %v276 = vld [vmem:[#allocation5 + $0x570] sm:$0xff]
    %v277 = vld [vmem:[#allocation5 + $0x578] sm:$0xff]
    %v278 = vld [vmem:[#allocation5 + $0x580] sm:$0xff]
    %v279 = vld [vmem:[#allocation5 + $0x588] sm:$0xff]
    %v280 = vld [vmem:[#allocation5 + $0x590] sm:$0xff]
    %v281 = vld [vmem:[#allocation5 + $0x598] sm:$0xff]
    %v282 = vld [vmem:[#allocation5 + $0x5a0] sm:$0xff]
    %v283 = vld [vmem:[#allocation5 + $0x5a8] sm:$0xff]
    %v284 = vld [vmem:[#allocation5 + $0x5b0] sm:$0xff]
    %v285 = vld [vmem:[#allocation5 + $0x5b8] sm:$0xff]
    %v286 = vld [vmem:[#allocation5 + $0x5c0] sm:$0xff]
    %v287 = vld [vmem:[#allocation5 + $0x5c8] sm:$0xff]
    %v288 = vld [vmem:[#allocation5 + $0x5d0] sm:$0xff]
    %v289 = vld [vmem:[#allocation5 + $0x5d8] sm:$0xff]
    %v290 = vld [vmem:[#allocation5 + $0x5e0] sm:$0xff]
    %v291 = vld [vmem:[#allocation5 + $0x5e8] sm:$0xff]
    %v292 = vld [vmem:[#allocation5 + $0x5f0] sm:$0xff]
    %v293 = vld [vmem:[#allocation5 + $0x5f8] sm:$0xff]
    %v294 = vld [vmem:[%s3] sm:$0xf]
    %v296 = vperm.slane %v294, 0
    %v297 = vperm.slane %v294, 1
    %v298 = vperm.slane %v294, 2
    %v299 = vperm.slane %v294, 3
    %v496 = vunpack.c.l.b16 %v102
    %v497 = vunpack.c.h.b16 %v102
    %v498 = vunpack.c.l.b16 %v103
    %v499 = vunpack.c.h.b16 %v103
    %v500 = vunpack.c.l.b16 %v104
    %v501 = vunpack.c.h.b16 %v104
    %v502 = vunpack.c.l.b16 %v105
    %v503 = vunpack.c.h.b16 %v105
    %v504 = vunpack.c.l.b16 %v106
    %v505 = vunpack.c.h.b16 %v106
    %v506 = vunpack.c.l.b16 %v107
    %v507 = vunpack.c.h.b16 %v107
    %v508 = vunpack.c.l.b16 %v108
    %v509 = vunpack.c.h.b16 %v108
    %v510 = vunpack.c.l.b16 %v109
    %v511 = vunpack.c.h.b16 %v109
    %v512 = vunpack.c.l.b16 %v110
    %v513 = vunpack.c.h.b16 %v110
    %v514 = vunpack.c.l.b16 %v111
    %v515 = vunpack.c.h.b16 %v111
    %v516 = vunpack.c.l.b16 %v112
    %v517 = vunpack.c.h.b16 %v112
    %v518 = vunpack.c.l.b16 %v113
    %v519 = vunpack.c.h.b16 %v113
    %v520 = vunpack.c.l.b16 %v114
    %v521 = vunpack.c.h.b16 %v114
    %v522 = vunpack.c.l.b16 %v115
    %v523 = vunpack.c.h.b16 %v115
    %v524 = vunpack.c.l.b16 %v116
    %v525 = vunpack.c.h.b16 %v116
    %v526 = vunpack.c.l.b16 %v117
    %v527 = vunpack.c.h.b16 %v117
    %v528 = vunpack.c.l.b16 %v118
    %v529 = vunpack.c.h.b16 %v118
    %v530 = vunpack.c.l.b16 %v119
    %v531 = vunpack.c.h.b16 %v119
    %v532 = vunpack.c.l.b16 %v120
    %v533 = vunpack.c.h.b16 %v120
    %v534 = vunpack.c.l.b16 %v121
    %v535 = vunpack.c.h.b16 %v121
    %v536 = vunpack.c.l.b16 %v122
    %v537 = vunpack.c.h.b16 %v122
    %v538 = vunpack.c.l.b16 %v123
    %v539 = vunpack.c.h.b16 %v123
    %v540 = vunpack.c.l.b16 %v124
    %v541 = vunpack.c.h.b16 %v124
    %v542 = vunpack.c.l.b16 %v125
    %v543 = vunpack.c.h.b16 %v125
    %v544 = vunpack.c.l.b16 %v126
    %v545 = vunpack.c.h.b16 %v126
    %v546 = vunpack.c.l.b16 %v127
    %v547 = vunpack.c.h.b16 %v127
    %v548 = vunpack.c.l.b16 %v128
    %v549 = vunpack.c.h.b16 %v128
    %v550 = vunpack.c.l.b16 %v129
    %v551 = vunpack.c.h.b16 %v129
    %v552 = vunpack.c.l.b16 %v130
    %v553 = vunpack.c.h.b16 %v130
    %v554 = vunpack.c.l.b16 %v131
    %v555 = vunpack.c.h.b16 %v131
    %v556 = vunpack.c.l.b16 %v132
    %v557 = vunpack.c.h.b16 %v132
    %v558 = vunpack.c.l.b16 %v133
    %v559 = vunpack.c.h.b16 %v133
    %v560 = vunpack.c.l.b16 %v134
    %v561 = vunpack.c.h.b16 %v134
    %v562 = vunpack.c.l.b16 %v135
    %v563 = vunpack.c.h.b16 %v135
    %v564 = vunpack.c.l.b16 %v136
    %v565 = vunpack.c.h.b16 %v136
    %v566 = vunpack.c.l.b16 %v137
    %v567 = vunpack.c.h.b16 %v137
    %v568 = vunpack.c.l.b16 %v138
    %v569 = vunpack.c.h.b16 %v138
    %v570 = vunpack.c.l.b16 %v139
    %v571 = vunpack.c.h.b16 %v139
    %v572 = vunpack.c.l.b16 %v140
    %v573 = vunpack.c.h.b16 %v140
    %v574 = vunpack.c.l.b16 %v141
    %v575 = vunpack.c.h.b16 %v141
    %v576 = vunpack.c.l.b16 %v142
    %v577 = vunpack.c.h.b16 %v142
    %v578 = vunpack.c.l.b16 %v143
    %v579 = vunpack.c.h.b16 %v143
    %v580 = vunpack.c.l.b16 %v144
    %v581 = vunpack.c.h.b16 %v144
    %v582 = vunpack.c.l.b16 %v145
    %v583 = vunpack.c.h.b16 %v145
    %v584 = vunpack.c.l.b16 %v146
    %v585 = vunpack.c.h.b16 %v146
    %v586 = vunpack.c.l.b16 %v147
    %v587 = vunpack.c.h.b16 %v147
    %v588 = vunpack.c.l.b16 %v148
    %v589 = vunpack.c.h.b16 %v148
    %v590 = vunpack.c.l.b16 %v149
    %v591 = vunpack.c.h.b16 %v149
    %v592 = vunpack.c.l.b16 %v150
    %v593 = vunpack.c.h.b16 %v150
    %v594 = vunpack.c.l.b16 %v151
    %v595 = vunpack.c.h.b16 %v151
    %v596 = vunpack.c.l.b16 %v152
    %v597 = vunpack.c.h.b16 %v152
    %v598 = vunpack.c.l.b16 %v153
    %v599 = vunpack.c.h.b16 %v153
    %v600 = vunpack.c.l.b16 %v154
    %v601 = vunpack.c.h.b16 %v154
    %v602 = vunpack.c.l.b16 %v155
    %v603 = vunpack.c.h.b16 %v155
    %v604 = vunpack.c.l.b16 %v156
    %v605 = vunpack.c.h.b16 %v156
    %v606 = vunpack.c.l.b16 %v157
    %v607 = vunpack.c.h.b16 %v157
    %v608 = vunpack.c.l.b16 %v158
    %v609 = vunpack.c.h.b16 %v158
    %v610 = vunpack.c.l.b16 %v159
    %v611 = vunpack.c.h.b16 %v159
    %v612 = vunpack.c.l.b16 %v160
    %v613 = vunpack.c.h.b16 %v160
    %v614 = vunpack.c.l.b16 %v161
    %v615 = vunpack.c.h.b16 %v161
    %v616 = vunpack.c.l.b16 %v162
    %v617 = vunpack.c.h.b16 %v162
    %v618 = vunpack.c.l.b16 %v163
    %v619 = vunpack.c.h.b16 %v163
    %v620 = vunpack.c.l.b16 %v164
    %v621 = vunpack.c.h.b16 %v164
    %v622 = vunpack.c.l.b16 %v165
    %v623 = vunpack.c.h.b16 %v165
    %v624 = vunpack.c.l.b16 %v166
    %v625 = vunpack.c.h.b16 %v166
    %v626 = vunpack.c.l.b16 %v167
    %v627 = vunpack.c.h.b16 %v167
    %v628 = vunpack.c.l.b16 %v168
    %v629 = vunpack.c.h.b16 %v168
    %v630 = vunpack.c.l.b16 %v169
    %v631 = vunpack.c.h.b16 %v169
    %v632 = vunpack.c.l.b16 %v170
    %v633 = vunpack.c.h.b16 %v170
    %v634 = vunpack.c.l.b16 %v171
    %v635 = vunpack.c.h.b16 %v171
    %v636 = vunpack.c.l.b16 %v172
    %v637 = vunpack.c.h.b16 %v172
    %v638 = vunpack.c.l.b16 %v173
    %v639 = vunpack.c.h.b16 %v173
    %v640 = vunpack.c.l.b16 %v174
    %v641 = vunpack.c.h.b16 %v174
    %v642 = vunpack.c.l.b16 %v175
    %v643 = vunpack.c.h.b16 %v175
    %v644 = vunpack.c.l.b16 %v176
    %v645 = vunpack.c.h.b16 %v176
    %v646 = vunpack.c.l.b16 %v177
    %v647 = vunpack.c.h.b16 %v177
    %v648 = vunpack.c.l.b16 %v178
    %v649 = vunpack.c.h.b16 %v178
    %v650 = vunpack.c.l.b16 %v179
    %v651 = vunpack.c.h.b16 %v179
    %v652 = vunpack.c.l.b16 %v180
    %v653 = vunpack.c.h.b16 %v180
    %v654 = vunpack.c.l.b16 %v181
    %v655 = vunpack.c.h.b16 %v181
    %v656 = vunpack.c.l.b16 %v182
    %v657 = vunpack.c.h.b16 %v182
    %v658 = vunpack.c.l.b16 %v183
    %v659 = vunpack.c.h.b16 %v183
    %v660 = vunpack.c.l.b16 %v184
    %v661 = vunpack.c.h.b16 %v184
    %v662 = vunpack.c.l.b16 %v185
    %v663 = vunpack.c.h.b16 %v185
    %v664 = vunpack.c.l.b16 %v186
    %v665 = vunpack.c.h.b16 %v186
    %v666 = vunpack.c.l.b16 %v187
    %v667 = vunpack.c.h.b16 %v187
    %v668 = vunpack.c.l.b16 %v188
    %v669 = vunpack.c.h.b16 %v188
    %v670 = vunpack.c.l.b16 %v189
    %v671 = vunpack.c.h.b16 %v189
    %v672 = vunpack.c.l.b16 %v190
    %v673 = vunpack.c.h.b16 %v190
    %v674 = vunpack.c.l.b16 %v191
    %v675 = vunpack.c.h.b16 %v191
    %v676 = vunpack.c.l.b16 %v192
    %v677 = vunpack.c.h.b16 %v192
    %v678 = vunpack.c.l.b16 %v193
    %v679 = vunpack.c.h.b16 %v193
    %v680 = vunpack.c.l.b16 %v194
    %v681 = vunpack.c.h.b16 %v194
    %v682 = vunpack.c.l.b16 %v195
    %v683 = vunpack.c.h.b16 %v195
    %v684 = vunpack.c.l.b16 %v196
    %v685 = vunpack.c.h.b16 %v196
    %v686 = vunpack.c.l.b16 %v197
    %v687 = vunpack.c.h.b16 %v197
    %v688 = vunpack.c.l.b16 %v198
    %v689 = vunpack.c.h.b16 %v198
    %v690 = vunpack.c.l.b16 %v199
    %v691 = vunpack.c.h.b16 %v199
    %v692 = vunpack.c.l.b16 %v200
    %v693 = vunpack.c.h.b16 %v200
    %v694 = vunpack.c.l.b16 %v201
    %v695 = vunpack.c.h.b16 %v201
    %v696 = vunpack.c.l.b16 %v202
    %v697 = vunpack.c.h.b16 %v202
    %v698 = vunpack.c.l.b16 %v203
    %v699 = vunpack.c.h.b16 %v203
    %v700 = vunpack.c.l.b16 %v204
    %v701 = vunpack.c.h.b16 %v204
    %v702 = vunpack.c.l.b16 %v205
    %v703 = vunpack.c.h.b16 %v205
    %v704 = vunpack.c.l.b16 %v206
    %v705 = vunpack.c.h.b16 %v206
    %v706 = vunpack.c.l.b16 %v207
    %v707 = vunpack.c.h.b16 %v207
    %v708 = vunpack.c.l.b16 %v208
    %v709 = vunpack.c.h.b16 %v208
    %v710 = vunpack.c.l.b16 %v209
    %v711 = vunpack.c.h.b16 %v209
    %v712 = vunpack.c.l.b16 %v210
    %v713 = vunpack.c.h.b16 %v210
    %v714 = vunpack.c.l.b16 %v211
    %v715 = vunpack.c.h.b16 %v211
    %v716 = vunpack.c.l.b16 %v212
    %v717 = vunpack.c.h.b16 %v212
    %v718 = vunpack.c.l.b16 %v213
    %v719 = vunpack.c.h.b16 %v213
    %v720 = vunpack.c.l.b16 %v214
    %v721 = vunpack.c.h.b16 %v214
    %v722 = vunpack.c.l.b16 %v215
    %v723 = vunpack.c.h.b16 %v215
    %v724 = vunpack.c.l.b16 %v216
    %v725 = vunpack.c.h.b16 %v216
    %v726 = vunpack.c.l.b16 %v217
    %v727 = vunpack.c.h.b16 %v217
    %v728 = vunpack.c.l.b16 %v218
    %v729 = vunpack.c.h.b16 %v218
    %v730 = vunpack.c.l.b16 %v219
    %v731 = vunpack.c.h.b16 %v219
    %v732 = vunpack.c.l.b16 %v220
    %v733 = vunpack.c.h.b16 %v220
    %v734 = vunpack.c.l.b16 %v221
    %v735 = vunpack.c.h.b16 %v221
    %v736 = vunpack.c.l.b16 %v222
    %v737 = vunpack.c.h.b16 %v222
    %v738 = vunpack.c.l.b16 %v223
    %v739 = vunpack.c.h.b16 %v223
    %v740 = vunpack.c.l.b16 %v224
    %v741 = vunpack.c.h.b16 %v224
    %v742 = vunpack.c.l.b16 %v225
    %v743 = vunpack.c.h.b16 %v225
    %v744 = vunpack.c.l.b16 %v226
    %v745 = vunpack.c.h.b16 %v226
    %v746 = vunpack.c.l.b16 %v227
    %v747 = vunpack.c.h.b16 %v227
    %v748 = vunpack.c.l.b16 %v228
    %v749 = vunpack.c.h.b16 %v228
    %v750 = vunpack.c.l.b16 %v229
    %v751 = vunpack.c.h.b16 %v229
    %v752 = vunpack.c.l.b16 %v230
    %v753 = vunpack.c.h.b16 %v230
    %v754 = vunpack.c.l.b16 %v231
    %v755 = vunpack.c.h.b16 %v231
    %v756 = vunpack.c.l.b16 %v232
    %v757 = vunpack.c.h.b16 %v232
    %v758 = vunpack.c.l.b16 %v233
    %v759 = vunpack.c.h.b16 %v233
    %v760 = vunpack.c.l.b16 %v234
    %v761 = vunpack.c.h.b16 %v234
    %v762 = vunpack.c.l.b16 %v235
    %v763 = vunpack.c.h.b16 %v235
    %v764 = vunpack.c.l.b16 %v236
    %v765 = vunpack.c.h.b16 %v236
    %v766 = vunpack.c.l.b16 %v237
    %v767 = vunpack.c.h.b16 %v237
    %v768 = vunpack.c.l.b16 %v238
    %v769 = vunpack.c.h.b16 %v238
    %v770 = vunpack.c.l.b16 %v239
    %v771 = vunpack.c.h.b16 %v239
    %v772 = vunpack.c.l.b16 %v240
    %v773 = vunpack.c.h.b16 %v240
    %v774 = vunpack.c.l.b16 %v241
    %v775 = vunpack.c.h.b16 %v241
    %v776 = vunpack.c.l.b16 %v242
    %v777 = vunpack.c.h.b16 %v242
    %v778 = vunpack.c.l.b16 %v243
    %v779 = vunpack.c.h.b16 %v243
    %v780 = vunpack.c.l.b16 %v244
    %v781 = vunpack.c.h.b16 %v244
    %v782 = vunpack.c.l.b16 %v245
    %v783 = vunpack.c.h.b16 %v245
    %v784 = vunpack.c.l.b16 %v246
    %v785 = vunpack.c.h.b16 %v246
    %v786 = vunpack.c.l.b16 %v247
    %v787 = vunpack.c.h.b16 %v247
    %v788 = vunpack.c.l.b16 %v248
    %v789 = vunpack.c.h.b16 %v248
    %v790 = vunpack.c.l.b16 %v249
    %v791 = vunpack.c.h.b16 %v249
    %v792 = vunpack.c.l.b16 %v250
    %v793 = vunpack.c.h.b16 %v250
    %v794 = vunpack.c.l.b16 %v251
    %v795 = vunpack.c.h.b16 %v251
    %v796 = vunpack.c.l.b16 %v252
    %v797 = vunpack.c.h.b16 %v252
    %v798 = vunpack.c.l.b16 %v253
    %v799 = vunpack.c.h.b16 %v253
    %v800 = vunpack.c.l.b16 %v254
    %v801 = vunpack.c.h.b16 %v254
    %v802 = vunpack.c.l.b16 %v255
    %v803 = vunpack.c.h.b16 %v255
    %v804 = vunpack.c.l.b16 %v256
    %v805 = vunpack.c.h.b16 %v256
    %v806 = vunpack.c.l.b16 %v257
    %v807 = vunpack.c.h.b16 %v257
    %v808 = vunpack.c.l.b16 %v258
    %v809 = vunpack.c.h.b16 %v258
    %v810 = vunpack.c.l.b16 %v259
    %v811 = vunpack.c.h.b16 %v259
    %v812 = vunpack.c.l.b16 %v260
    %v813 = vunpack.c.h.b16 %v260
    %v814 = vunpack.c.l.b16 %v261
    %v815 = vunpack.c.h.b16 %v261
    %v816 = vunpack.c.l.b16 %v262
    %v817 = vunpack.c.h.b16 %v262
    %v818 = vunpack.c.l.b16 %v263
    %v819 = vunpack.c.h.b16 %v263
    %v820 = vunpack.c.l.b16 %v264
    %v821 = vunpack.c.h.b16 %v264
    %v822 = vunpack.c.l.b16 %v265
    %v823 = vunpack.c.h.b16 %v265
    %v824 = vunpack.c.l.b16 %v266
    %v825 = vunpack.c.h.b16 %v266
    %v826 = vunpack.c.l.b16 %v267
    %v827 = vunpack.c.h.b16 %v267
    %v828 = vunpack.c.l.b16 %v268
    %v829 = vunpack.c.h.b16 %v268
    %v830 = vunpack.c.l.b16 %v269
    %v831 = vunpack.c.h.b16 %v269
    %v832 = vunpack.c.l.b16 %v270
    %v833 = vunpack.c.h.b16 %v270
    %v834 = vunpack.c.l.b16 %v271
    %v835 = vunpack.c.h.b16 %v271
    %v836 = vunpack.c.l.b16 %v272
    %v837 = vunpack.c.h.b16 %v272
    %v838 = vunpack.c.l.b16 %v273
    %v839 = vunpack.c.h.b16 %v273
    %v840 = vunpack.c.l.b16 %v274
    %v841 = vunpack.c.h.b16 %v274
    %v842 = vunpack.c.l.b16 %v275
    %v843 = vunpack.c.h.b16 %v275
    %v844 = vunpack.c.l.b16 %v276
    %v845 = vunpack.c.h.b16 %v276
    %v846 = vunpack.c.l.b16 %v277
    %v847 = vunpack.c.h.b16 %v277
    %v848 = vunpack.c.l.b16 %v278
    %v849 = vunpack.c.h.b16 %v278
    %v850 = vunpack.c.l.b16 %v279
    %v851 = vunpack.c.h.b16 %v279
    %v852 = vunpack.c.l.b16 %v280
    %v853 = vunpack.c.h.b16 %v280
    %v854 = vunpack.c.l.b16 %v281
    %v855 = vunpack.c.h.b16 %v281
    %v856 = vunpack.c.l.b16 %v282
    %v857 = vunpack.c.h.b16 %v282
    %v858 = vunpack.c.l.b16 %v283
    %v859 = vunpack.c.h.b16 %v283
    %v860 = vunpack.c.l.b16 %v284
    %v861 = vunpack.c.h.b16 %v284
    %v862 = vunpack.c.l.b16 %v285
    %v863 = vunpack.c.h.b16 %v285
    %v864 = vunpack.c.l.b16 %v286
    %v865 = vunpack.c.h.b16 %v286
    %v866 = vunpack.c.l.b16 %v287
    %v867 = vunpack.c.h.b16 %v287
    %v868 = vunpack.c.l.b16 %v288
    %v869 = vunpack.c.h.b16 %v288
    %v870 = vunpack.c.l.b16 %v289
    %v871 = vunpack.c.h.b16 %v289
    %v872 = vunpack.c.l.b16 %v290
    %v873 = vunpack.c.h.b16 %v290
    %v874 = vunpack.c.l.b16 %v291
    %v875 = vunpack.c.h.b16 %v291
    %v876 = vunpack.c.l.b16 %v292
    %v877 = vunpack.c.h.b16 %v292
    %v878 = vunpack.c.l.b16 %v293
    %v879 = vunpack.c.h.b16 %v293
    %v880 = vpack.c.b16 %v500, %v496
    %v881 = vpack.c.b16 %v501, %v497
    %v882 = vpack.c.b16 %v502, %v498
    %v883 = vpack.c.b16 %v503, %v499
    %v884 = vpack.c.b16 %v508, %v504
    %v885 = vpack.c.b16 %v509, %v505
    %v886 = vpack.c.b16 %v510, %v506
    %v887 = vpack.c.b16 %v511, %v507
    %v888 = vpack.c.b16 %v516, %v512
    %v889 = vpack.c.b16 %v517, %v513
    %v890 = vpack.c.b16 %v518, %v514
    %v891 = vpack.c.b16 %v519, %v515
    %v892 = vpack.c.b16 %v524, %v520
    %v893 = vpack.c.b16 %v525, %v521
    %v894 = vpack.c.b16 %v526, %v522
    %v895 = vpack.c.b16 %v527, %v523
    %v896 = vpack.c.b16 %v532, %v528
    %v897 = vpack.c.b16 %v533, %v529
    %v898 = vpack.c.b16 %v534, %v530
    %v899 = vpack.c.b16 %v535, %v531
    %v900 = vpack.c.b16 %v540, %v536
    %v901 = vpack.c.b16 %v541, %v537
    %v902 = vpack.c.b16 %v542, %v538
    %v903 = vpack.c.b16 %v543, %v539
    %v904 = vpack.c.b16 %v548, %v544
    %v905 = vpack.c.b16 %v549, %v545
    %v906 = vpack.c.b16 %v550, %v546
    %v907 = vpack.c.b16 %v551, %v547
    %v908 = vpack.c.b16 %v556, %v552
    %v909 = vpack.c.b16 %v557, %v553
    %v910 = vpack.c.b16 %v558, %v554
    %v911 = vpack.c.b16 %v559, %v555
    %v912 = vpack.c.b16 %v564, %v560
    %v913 = vpack.c.b16 %v565, %v561
    %v914 = vpack.c.b16 %v566, %v562
    %v915 = vpack.c.b16 %v567, %v563
    %v916 = vpack.c.b16 %v572, %v568
    %v917 = vpack.c.b16 %v573, %v569
    %v918 = vpack.c.b16 %v574, %v570
    %v919 = vpack.c.b16 %v575, %v571
    %v920 = vpack.c.b16 %v580, %v576
    %v921 = vpack.c.b16 %v581, %v577
    %v922 = vpack.c.b16 %v582, %v578
    %v923 = vpack.c.b16 %v583, %v579
    %v924 = vpack.c.b16 %v588, %v584
    %v925 = vpack.c.b16 %v589, %v585
    %v926 = vpack.c.b16 %v590, %v586
    %v927 = vpack.c.b16 %v591, %v587
    %v928 = vpack.c.b16 %v596, %v592
    %v929 = vpack.c.b16 %v597, %v593
    %v930 = vpack.c.b16 %v598, %v594
    %v931 = vpack.c.b16 %v599, %v595
    %v932 = vpack.c.b16 %v604, %v600
    %v933 = vpack.c.b16 %v605, %v601
    %v934 = vpack.c.b16 %v606, %v602
    %v935 = vpack.c.b16 %v607, %v603
    %v936 = vpack.c.b16 %v612, %v608
    %v937 = vpack.c.b16 %v613, %v609
    %v938 = vpack.c.b16 %v614, %v610
    %v939 = vpack.c.b16 %v615, %v611
    %v940 = vpack.c.b16 %v620, %v616
    %v941 = vpack.c.b16 %v621, %v617
    %v942 = vpack.c.b16 %v622, %v618
    %v943 = vpack.c.b16 %v623, %v619
    %v944 = vpack.c.b16 %v628, %v624
    %v945 = vpack.c.b16 %v629, %v625
    %v946 = vpack.c.b16 %v630, %v626
    %v947 = vpack.c.b16 %v631, %v627
    %v948 = vpack.c.b16 %v636, %v632
    %v949 = vpack.c.b16 %v637, %v633
    %v950 = vpack.c.b16 %v638, %v634
    %v951 = vpack.c.b16 %v639, %v635
    %v952 = vpack.c.b16 %v644, %v640
    %v953 = vpack.c.b16 %v645, %v641
    %v954 = vpack.c.b16 %v646, %v642
    %v955 = vpack.c.b16 %v647, %v643
    %v956 = vpack.c.b16 %v652, %v648
    %v957 = vpack.c.b16 %v653, %v649
    %v958 = vpack.c.b16 %v654, %v650
    %v959 = vpack.c.b16 %v655, %v651
    %v960 = vpack.c.b16 %v660, %v656
    %v961 = vpack.c.b16 %v661, %v657
    %v962 = vpack.c.b16 %v662, %v658
    %v963 = vpack.c.b16 %v663, %v659
    %v964 = vpack.c.b16 %v668, %v664
    %v965 = vpack.c.b16 %v669, %v665
    %v966 = vpack.c.b16 %v670, %v666
    %v967 = vpack.c.b16 %v671, %v667
    %v968 = vpack.c.b16 %v676, %v672
    %v969 = vpack.c.b16 %v677, %v673
    %v970 = vpack.c.b16 %v678, %v674
    %v971 = vpack.c.b16 %v679, %v675
    %v972 = vpack.c.b16 %v684, %v680
    %v973 = vpack.c.b16 %v685, %v681
    %v974 = vpack.c.b16 %v686, %v682
    %v975 = vpack.c.b16 %v687, %v683
    %v976 = vpack.c.b16 %v692, %v688
    %v977 = vpack.c.b16 %v693, %v689
    %v978 = vpack.c.b16 %v694, %v690
    %v979 = vpack.c.b16 %v695, %v691
    %v980 = vpack.c.b16 %v700, %v696
    %v981 = vpack.c.b16 %v701, %v697
    %v982 = vpack.c.b16 %v702, %v698
    %v983 = vpack.c.b16 %v703, %v699
    %v984 = vpack.c.b16 %v708, %v704
    %v985 = vpack.c.b16 %v709, %v705
    %v986 = vpack.c.b16 %v710, %v706
    %v987 = vpack.c.b16 %v711, %v707
    %v988 = vpack.c.b16 %v716, %v712
    %v989 = vpack.c.b16 %v717, %v713
    %v990 = vpack.c.b16 %v718, %v714
    %v991 = vpack.c.b16 %v719, %v715
    %v992 = vpack.c.b16 %v724, %v720
    %v993 = vpack.c.b16 %v725, %v721
    %v994 = vpack.c.b16 %v726, %v722
    %v995 = vpack.c.b16 %v727, %v723
    %v996 = vpack.c.b16 %v732, %v728
    %v997 = vpack.c.b16 %v733, %v729
    %v998 = vpack.c.b16 %v734, %v730
    %v999 = vpack.c.b16 %v735, %v731
    %v1000 = vpack.c.b16 %v740, %v736
    %v1001 = vpack.c.b16 %v741, %v737
    %v1002 = vpack.c.b16 %v742, %v738
    %v1003 = vpack.c.b16 %v743, %v739
    %v1004 = vpack.c.b16 %v748, %v744
    %v1005 = vpack.c.b16 %v749, %v745
    %v1006 = vpack.c.b16 %v750, %v746
    %v1007 = vpack.c.b16 %v751, %v747
    %v1008 = vpack.c.b16 %v756, %v752
    %v1009 = vpack.c.b16 %v757, %v753
    %v1010 = vpack.c.b16 %v758, %v754
    %v1011 = vpack.c.b16 %v759, %v755
    %v1012 = vpack.c.b16 %v764, %v760
    %v1013 = vpack.c.b16 %v765, %v761
    %v1014 = vpack.c.b16 %v766, %v762
    %v1015 = vpack.c.b16 %v767, %v763
    %v1016 = vpack.c.b16 %v772, %v768
    %v1017 = vpack.c.b16 %v773, %v769
    %v1018 = vpack.c.b16 %v774, %v770
    %v1019 = vpack.c.b16 %v775, %v771
    %v1020 = vpack.c.b16 %v780, %v776
    %v1021 = vpack.c.b16 %v781, %v777
    %v1022 = vpack.c.b16 %v782, %v778
    %v1023 = vpack.c.b16 %v783, %v779
    %v1024 = vpack.c.b16 %v788, %v784
    %v1025 = vpack.c.b16 %v789, %v785
    %v1026 = vpack.c.b16 %v790, %v786
    %v1027 = vpack.c.b16 %v791, %v787
    %v1028 = vpack.c.b16 %v796, %v792
    %v1029 = vpack.c.b16 %v797, %v793
    %v1030 = vpack.c.b16 %v798, %v794
    %v1031 = vpack.c.b16 %v799, %v795
    %v1032 = vpack.c.b16 %v804, %v800
    %v1033 = vpack.c.b16 %v805, %v801
    %v1034 = vpack.c.b16 %v806, %v802
    %v1035 = vpack.c.b16 %v807, %v803
    %v1036 = vpack.c.b16 %v812, %v808
    %v1037 = vpack.c.b16 %v813, %v809
    %v1038 = vpack.c.b16 %v814, %v810
    %v1039 = vpack.c.b16 %v815, %v811
    %v1040 = vpack.c.b16 %v820, %v816
    %v1041 = vpack.c.b16 %v821, %v817
    %v1042 = vpack.c.b16 %v822, %v818
    %v1043 = vpack.c.b16 %v823, %v819
    %v1044 = vpack.c.b16 %v828, %v824
    %v1045 = vpack.c.b16 %v829, %v825
    %v1046 = vpack.c.b16 %v830, %v826
    %v1047 = vpack.c.b16 %v831, %v827
    %v1048 = vpack.c.b16 %v836, %v832
    %v1049 = vpack.c.b16 %v837, %v833
    %v1050 = vpack.c.b16 %v838, %v834
    %v1051 = vpack.c.b16 %v839, %v835
    %v1052 = vpack.c.b16 %v844, %v840
    %v1053 = vpack.c.b16 %v845, %v841
    %v1054 = vpack.c.b16 %v846, %v842
    %v1055 = vpack.c.b16 %v847, %v843
    %v1056 = vpack.c.b16 %v852, %v848
    %v1057 = vpack.c.b16 %v853, %v849
    %v1058 = vpack.c.b16 %v854, %v850
    %v1059 = vpack.c.b16 %v855, %v851
    %v1060 = vpack.c.b16 %v860, %v856
    %v1061 = vpack.c.b16 %v861, %v857
    %v1062 = vpack.c.b16 %v862, %v858
    %v1063 = vpack.c.b16 %v863, %v859
    %v1064 = vpack.c.b16 %v868, %v864
    %v1065 = vpack.c.b16 %v869, %v865
    %v1066 = vpack.c.b16 %v870, %v866
    %v1067 = vpack.c.b16 %v871, %v867
    %v1068 = vpack.c.b16 %v876, %v872
    %v1069 = vpack.c.b16 %v877, %v873
    %v1070 = vpack.c.b16 %v878, %v874
    %v1071 = vpack.c.b16 %v879, %v875
    %1264 = vmatpush.bf16.msra.mxu0 %v908
    %1265 = vmatpush.bf16.msra.mxu0 %v904
    %1266 = vmatpush.bf16.msra.mxu0 %v900
    %1267 = vmatpush.bf16.msra.mxu0 %v896
    %1268 = vmatpush.bf16.msra.mxu0 %v892
    %1269 = vmatpush.bf16.msra.mxu0 %v888
    %1270 = vmatpush.bf16.msra.mxu0 %v884
    %1271 = vmatpush.bf16.msra.mxu0 %v880
    %1272 = vmatmul.bf16.gmra.mxu0 %v96
    %v1273 = vpop.f32.mrf.mxu0
    %v1274 = vadd.f32 %v296, %v1273
    %v1275 = vpop.f32.mrf.mxu0
    %1276 = vdwg.mxu0
    %1277 = vmatpush.bf16.msra.mxu0 %v940
    %1278 = vmatpush.bf16.msra.mxu0 %v936
    %1279 = vmatpush.bf16.msra.mxu0 %v932
    %1280 = vmatpush.bf16.msra.mxu0 %v928
    %1281 = vmatpush.bf16.msra.mxu0 %v924
    %1282 = vmatpush.bf16.msra.mxu0 %v920
    %1283 = vmatpush.bf16.msra.mxu0 %v916
    %1284 = vmatpush.bf16.msra.mxu0 %v912
    %1285 = vmatmul.bf16.gmra.mxu0 %v97
    %v1286 = vpop.f32.mrf.mxu0
    %v1287 = vadd.f32 %v1274, %v1286
    %v1288 = vpop.f32.mrf.mxu0
    %1289 = vdwg.mxu0
    %1290 = vmatpush.bf16.msra.mxu0 %v972
    %1291 = vmatpush.bf16.msra.mxu0 %v968
    %1292 = vmatpush.bf16.msra.mxu0 %v964
    %1293 = vmatpush.bf16.msra.mxu0 %v960
    %1294 = vmatpush.bf16.msra.mxu0 %v956
    %1295 = vmatpush.bf16.msra.mxu0 %v952
    %1296 = vmatpush.bf16.msra.mxu0 %v948
    %1297 = vmatpush.bf16.msra.mxu0 %v944
    %1298 = vmatmul.bf16.gmra.mxu0 %v98
    %v1299 = vpop.f32.mrf.mxu0
    %v1300 = vadd.f32 %v1287, %v1299
    %v1301 = vpop.f32.mrf.mxu0
    %1302 = vdwg.mxu0
    %1303 = vmatpush.bf16.msra.mxu0 %v1004
    %1304 = vmatpush.bf16.msra.mxu0 %v1000
    %1305 = vmatpush.bf16.msra.mxu0 %v996
    %1306 = vmatpush.bf16.msra.mxu0 %v992
    %1307 = vmatpush.bf16.msra.mxu0 %v988
    %1308 = vmatpush.bf16.msra.mxu0 %v984
    %1309 = vmatpush.bf16.msra.mxu0 %v980
    %1310 = vmatpush.bf16.msra.mxu0 %v976
    %1311 = vmatmul.bf16.gmra.mxu0 %v99
    %v1312 = vpop.f32.mrf.mxu0
    %v1313 = vadd.f32 %v1300, %v1312
    %v1314 = vpop.f32.mrf.mxu0
    %1315 = vdwg.mxu0
    %1316 = vmatpush.bf16.msra.mxu0 %v1036
    %1317 = vmatpush.bf16.msra.mxu0 %v1032
    %1318 = vmatpush.bf16.msra.mxu0 %v1028
    %1319 = vmatpush.bf16.msra.mxu0 %v1024
    %1320 = vmatpush.bf16.msra.mxu0 %v1020
    %1321 = vmatpush.bf16.msra.mxu0 %v1016
    %1322 = vmatpush.bf16.msra.mxu0 %v1012
    %1323 = vmatpush.bf16.msra.mxu0 %v1008
    %1324 = vmatmul.bf16.gmra.mxu0 %v100
    %v1325 = vpop.f32.mrf.mxu0
    %v1326 = vadd.f32 %v1313, %v1325
    %v1327 = vpop.f32.mrf.mxu0
    %1328 = vdwg.mxu0
    %1329 = vmatpush.bf16.msra.mxu0 %v1068
    %1330 = vmatpush.bf16.msra.mxu0 %v1064
    %1331 = vmatpush.bf16.msra.mxu0 %v1060
    %1332 = vmatpush.bf16.msra.mxu0 %v1056
    %1333 = vmatpush.bf16.msra.mxu0 %v1052
    %1334 = vmatpush.bf16.msra.mxu0 %v1048
    %1335 = vmatpush.bf16.msra.mxu0 %v1044
    %1336 = vmatpush.bf16.msra.mxu0 %v1040
    %1337 = vmatmul.bf16.gmra.mxu0 %v101
    %v1338 = vpop.f32.mrf.mxu0
    %v1339 = vadd.f32 %v1326, %v1338
    %v1340 = vpop.f32.mrf.mxu0
    %1341 = vdwg.mxu0
    %1342 = vmatpush.bf16.msra.mxu0 %v909
    %1343 = vmatpush.bf16.msra.mxu0 %v905
    %1344 = vmatpush.bf16.msra.mxu0 %v901
    %1345 = vmatpush.bf16.msra.mxu0 %v897
    %1346 = vmatpush.bf16.msra.mxu0 %v893
    %1347 = vmatpush.bf16.msra.mxu0 %v889
    %1348 = vmatpush.bf16.msra.mxu0 %v885
    %1349 = vmatpush.bf16.msra.mxu0 %v881
    %1350 = vmatmul.bf16.gmra.mxu0 %v96
    %v1351 = vpop.f32.mrf.mxu0
    %v1352 = vadd.f32 %v297, %v1351
    %v1353 = vpop.f32.mrf.mxu0
    %1354 = vdwg.mxu0
    %1355 = vmatpush.bf16.msra.mxu0 %v941
    %1356 = vmatpush.bf16.msra.mxu0 %v937
    %1357 = vmatpush.bf16.msra.mxu0 %v933
    %1358 = vmatpush.bf16.msra.mxu0 %v929
    %1359 = vmatpush.bf16.msra.mxu0 %v925
    %1360 = vmatpush.bf16.msra.mxu0 %v921
    %1361 = vmatpush.bf16.msra.mxu0 %v917
    %1362 = vmatpush.bf16.msra.mxu0 %v913
    %1363 = vmatmul.bf16.gmra.mxu0 %v97
    %v1364 = vpop.f32.mrf.mxu0
    %v1365 = vadd.f32 %v1352, %v1364
    %v1366 = vpop.f32.mrf.mxu0
    %1367 = vdwg.mxu0
    %1368 = vmatpush.bf16.msra.mxu0 %v973
    %1369 = vmatpush.bf16.msra.mxu0 %v969
    %1370 = vmatpush.bf16.msra.mxu0 %v965
    %1371 = vmatpush.bf16.msra.mxu0 %v961
    %1372 = vmatpush.bf16.msra.mxu0 %v957
    %1373 = vmatpush.bf16.msra.mxu0 %v953
    %1374 = vmatpush.bf16.msra.mxu0 %v949
    %1375 = vmatpush.bf16.msra.mxu0 %v945
    %1376 = vmatmul.bf16.gmra.mxu0 %v98
    %v1377 = vpop.f32.mrf.mxu0
    %v1378 = vadd.f32 %v1365, %v1377
    %v1379 = vpop.f32.mrf.mxu0
    %1380 = vdwg.mxu0
    %1381 = vmatpush.bf16.msra.mxu0 %v1005
    %1382 = vmatpush.bf16.msra.mxu0 %v1001
    %1383 = vmatpush.bf16.msra.mxu0 %v997
    %1384 = vmatpush.bf16.msra.mxu0 %v993
    %1385 = vmatpush.bf16.msra.mxu0 %v989
    %1386 = vmatpush.bf16.msra.mxu0 %v985
    %1387 = vmatpush.bf16.msra.mxu0 %v981
    %1388 = vmatpush.bf16.msra.mxu0 %v977
    %1389 = vmatmul.bf16.gmra.mxu0 %v99
    %v1390 = vpop.f32.mrf.mxu0
    %v1391 = vadd.f32 %v1378, %v1390
    %v1392 = vpop.f32.mrf.mxu0
    %1393 = vdwg.mxu0
    %1394 = vmatpush.bf16.msra.mxu0 %v1037
    %1395 = vmatpush.bf16.msra.mxu0 %v1033
    %1396 = vmatpush.bf16.msra.mxu0 %v1029
    %1397 = vmatpush.bf16.msra.mxu0 %v1025
    %1398 = vmatpush.bf16.msra.mxu0 %v1021
    %1399 = vmatpush.bf16.msra.mxu0 %v1017
    %1400 = vmatpush.bf16.msra.mxu0 %v1013
    %1401 = vmatpush.bf16.msra.mxu0 %v1009
    %1402 = vmatmul.bf16.gmra.mxu0 %v100
    %v1403 = vpop.f32.mrf.mxu0
    %v1404 = vadd.f32 %v1391, %v1403
    %v1405 = vpop.f32.mrf.mxu0
    %1406 = vdwg.mxu0
    %1407 = vmatpush.bf16.msra.mxu0 %v1069
    %1408 = vmatpush.bf16.msra.mxu0 %v1065
    %1409 = vmatpush.bf16.msra.mxu0 %v1061
    %1410 = vmatpush.bf16.msra.mxu0 %v1057
    %1411 = vmatpush.bf16.msra.mxu0 %v1053
    %1412 = vmatpush.bf16.msra.mxu0 %v1049
    %1413 = vmatpush.bf16.msra.mxu0 %v1045
    %1414 = vmatpush.bf16.msra.mxu0 %v1041
    %1415 = vmatmul.bf16.gmra.mxu0 %v101
    %v1416 = vpop.f32.mrf.mxu0
    %v1417 = vadd.f32 %v1404, %v1416
    %v1418 = vpop.f32.mrf.mxu0
    %1419 = vdwg.mxu0
    %1420 = vmatpush.bf16.msra.mxu0 %v910
    %1421 = vmatpush.bf16.msra.mxu0 %v906
    %1422 = vmatpush.bf16.msra.mxu0 %v902
    %1423 = vmatpush.bf16.msra.mxu0 %v898
    %1424 = vmatpush.bf16.msra.mxu0 %v894
    %1425 = vmatpush.bf16.msra.mxu0 %v890
    %1426 = vmatpush.bf16.msra.mxu0 %v886
    %1427 = vmatpush.bf16.msra.mxu0 %v882
    %1428 = vmatmul.bf16.gmra.mxu0 %v96
    %v1429 = vpop.f32.mrf.mxu0
    %v1430 = vadd.f32 %v298, %v1429
    %v1431 = vpop.f32.mrf.mxu0
    %1432 = vdwg.mxu0
    %1433 = vmatpush.bf16.msra.mxu0 %v942
    %1434 = vmatpush.bf16.msra.mxu0 %v938
    %1435 = vmatpush.bf16.msra.mxu0 %v934
    %1436 = vmatpush.bf16.msra.mxu0 %v930
    %1437 = vmatpush.bf16.msra.mxu0 %v926
    %1438 = vmatpush.bf16.msra.mxu0 %v922
    %1439 = vmatpush.bf16.msra.mxu0 %v918
    %1440 = vmatpush.bf16.msra.mxu0 %v914
    %1441 = vmatmul.bf16.gmra.mxu0 %v97
    %v1442 = vpop.f32.mrf.mxu0
    %v1443 = vadd.f32 %v1430, %v1442
    %v1444 = vpop.f32.mrf.mxu0
    %1445 = vdwg.mxu0
    %1446 = vmatpush.bf16.msra.mxu0 %v974
    %1447 = vmatpush.bf16.msra.mxu0 %v970
    %1448 = vmatpush.bf16.msra.mxu0 %v966
    %1449 = vmatpush.bf16.msra.mxu0 %v962
    %1450 = vmatpush.bf16.msra.mxu0 %v958
    %1451 = vmatpush.bf16.msra.mxu0 %v954
    %1452 = vmatpush.bf16.msra.mxu0 %v950
    %1453 = vmatpush.bf16.msra.mxu0 %v946
    %1454 = vmatmul.bf16.gmra.mxu0 %v98
    %v1455 = vpop.f32.mrf.mxu0
    %v1456 = vadd.f32 %v1443, %v1455
    %v1457 = vpop.f32.mrf.mxu0
    %1458 = vdwg.mxu0
    %1459 = vmatpush.bf16.msra.mxu0 %v1006
    %1460 = vmatpush.bf16.msra.mxu0 %v1002
    %1461 = vmatpush.bf16.msra.mxu0 %v998
    %1462 = vmatpush.bf16.msra.mxu0 %v994
    %1463 = vmatpush.bf16.msra.mxu0 %v990
    %1464 = vmatpush.bf16.msra.mxu0 %v986
    %1465 = vmatpush.bf16.msra.mxu0 %v982
    %1466 = vmatpush.bf16.msra.mxu0 %v978
    %1467 = vmatmul.bf16.gmra.mxu0 %v99
    %v1468 = vpop.f32.mrf.mxu0
    %v1469 = vadd.f32 %v1456, %v1468
    %v1470 = vpop.f32.mrf.mxu0
    %1471 = vdwg.mxu0
    %1472 = vmatpush.bf16.msra.mxu0 %v1038
    %1473 = vmatpush.bf16.msra.mxu0 %v1034
    %1474 = vmatpush.bf16.msra.mxu0 %v1030
    %1475 = vmatpush.bf16.msra.mxu0 %v1026
    %1476 = vmatpush.bf16.msra.mxu0 %v1022
    %1477 = vmatpush.bf16.msra.mxu0 %v1018
    %1478 = vmatpush.bf16.msra.mxu0 %v1014
    %1479 = vmatpush.bf16.msra.mxu0 %v1010
    %1480 = vmatmul.bf16.gmra.mxu0 %v100
    %v1481 = vpop.f32.mrf.mxu0
    %v1482 = vadd.f32 %v1469, %v1481
    %v1483 = vpop.f32.mrf.mxu0
    %1484 = vdwg.mxu0
    %1485 = vmatpush.bf16.msra.mxu0 %v1070
    %1486 = vmatpush.bf16.msra.mxu0 %v1066
    %1487 = vmatpush.bf16.msra.mxu0 %v1062
    %1488 = vmatpush.bf16.msra.mxu0 %v1058
    %1489 = vmatpush.bf16.msra.mxu0 %v1054
    %1490 = vmatpush.bf16.msra.mxu0 %v1050
    %1491 = vmatpush.bf16.msra.mxu0 %v1046
    %1492 = vmatpush.bf16.msra.mxu0 %v1042
    %1493 = vmatmul.bf16.gmra.mxu0 %v101
    %v1494 = vpop.f32.mrf.mxu0
    %v1495 = vadd.f32 %v1482, %v1494
    %v1496 = vpop.f32.mrf.mxu0
    %1497 = vdwg.mxu0
    %1498 = vmatpush.bf16.msra.mxu0 %v911
    %1499 = vmatpush.bf16.msra.mxu0 %v907
    %1500 = vmatpush.bf16.msra.mxu0 %v903
    %1501 = vmatpush.bf16.msra.mxu0 %v899
    %1502 = vmatpush.bf16.msra.mxu0 %v895
    %1503 = vmatpush.bf16.msra.mxu0 %v891
    %1504 = vmatpush.bf16.msra.mxu0 %v887
    %1505 = vmatpush.bf16.msra.mxu0 %v883
    %1506 = vmatmul.bf16.gmra.mxu0 %v96
    %v1507 = vpop.f32.mrf.mxu0
    %v1508 = vadd.f32 %v299, %v1507
    %v1509 = vpop.f32.mrf.mxu0
    %1510 = vdwg.mxu0
    %1511 = vmatpush.bf16.msra.mxu0 %v943
    %1512 = vmatpush.bf16.msra.mxu0 %v939
    %1513 = vmatpush.bf16.msra.mxu0 %v935
    %1514 = vmatpush.bf16.msra.mxu0 %v931
    %1515 = vmatpush.bf16.msra.mxu0 %v927
    %1516 = vmatpush.bf16.msra.mxu0 %v923
    %1517 = vmatpush.bf16.msra.mxu0 %v919
    %1518 = vmatpush.bf16.msra.mxu0 %v915
    %1519 = vmatmul.bf16.gmra.mxu0 %v97
    %v1520 = vpop.f32.mrf.mxu0
    %v1521 = vadd.f32 %v1508, %v1520
    %v1522 = vpop.f32.mrf.mxu0
    %1523 = vdwg.mxu0
    %1524 = vmatpush.bf16.msra.mxu0 %v975
    %1525 = vmatpush.bf16.msra.mxu0 %v971
    %1526 = vmatpush.bf16.msra.mxu0 %v967
    %1527 = vmatpush.bf16.msra.mxu0 %v963
    %1528 = vmatpush.bf16.msra.mxu0 %v959
    %1529 = vmatpush.bf16.msra.mxu0 %v955
    %1530 = vmatpush.bf16.msra.mxu0 %v951
    %1531 = vmatpush.bf16.msra.mxu0 %v947
    %1532 = vmatmul.bf16.gmra.mxu0 %v98
    %v1533 = vpop.f32.mrf.mxu0
    %v1534 = vadd.f32 %v1521, %v1533
    %v1535 = vpop.f32.mrf.mxu0
    %1536 = vdwg.mxu0
    %1537 = vmatpush.bf16.msra.mxu0 %v1007
    %1538 = vmatpush.bf16.msra.mxu0 %v1003
    %1539 = vmatpush.bf16.msra.mxu0 %v999
    %1540 = vmatpush.bf16.msra.mxu0 %v995
    %1541 = vmatpush.bf16.msra.mxu0 %v991
    %1542 = vmatpush.bf16.msra.mxu0 %v987
    %1543 = vmatpush.bf16.msra.mxu0 %v983
    %1544 = vmatpush.bf16.msra.mxu0 %v979
    %1545 = vmatmul.bf16.gmra.mxu0 %v99
    %v1546 = vpop.f32.mrf.mxu0
    %v1547 = vadd.f32 %v1534, %v1546
    %v1548 = vpop.f32.mrf.mxu0
    %1549 = vdwg.mxu0
    %1550 = vmatpush.bf16.msra.mxu0 %v1039
    %1551 = vmatpush.bf16.msra.mxu0 %v1035
    %1552 = vmatpush.bf16.msra.mxu0 %v1031
    %1553 = vmatpush.bf16.msra.mxu0 %v1027
    %1554 = vmatpush.bf16.msra.mxu0 %v1023
    %1555 = vmatpush.bf16.msra.mxu0 %v1019
    %1556 = vmatpush.bf16.msra.mxu0 %v1015
    %1557 = vmatpush.bf16.msra.mxu0 %v1011
    %1558 = vmatmul.bf16.gmra.mxu0 %v100
    %v1559 = vpop.f32.mrf.mxu0
    %v1560 = vadd.f32 %v1547, %v1559
    %v1561 = vpop.f32.mrf.mxu0
    %1562 = vdwg.mxu0
    %1563 = vmatpush.bf16.msra.mxu0 %v1071
    %1564 = vmatpush.bf16.msra.mxu0 %v1067
    %1565 = vmatpush.bf16.msra.mxu0 %v1063
    %1566 = vmatpush.bf16.msra.mxu0 %v1059
    %1567 = vmatpush.bf16.msra.mxu0 %v1055
    %1568 = vmatpush.bf16.msra.mxu0 %v1051
    %1569 = vmatpush.bf16.msra.mxu0 %v1047
    %1570 = vmatpush.bf16.msra.mxu0 %v1043
    %1571 = vmatmul.bf16.gmra.mxu0 %v101
    %v1572 = vpop.f32.mrf.mxu0
    %v1573 = vadd.f32 %v1560, %v1572
    %v1574 = vpop.f32.mrf.mxu0
    %1575 = vdwg.mxu0
    %v1576 = vmax.f32 %v1339, 0.0
    %v1577 = vmax.f32 %v1417, 0.0
    %v1578 = vmax.f32 %v1495, 0.0
    %v1579 = vmax.f32 %v1573, 0.0
    %v1580 = vpack.c.bf16 %v1576, %v1576
    %v1581 = vpack.c.bf16 %v1577, %v1577
    %v1582 = vpack.c.bf16 %v1578, %v1578
    %v1583 = vpack.c.bf16 %v1579, %v1579
    %v1584 = vld [vmem:[#allocation7] sm:$0xf]
    %v1585 = vld [vmem:[#allocation7 + $0x4] sm:$0xf]
    %v1586 = vld [vmem:[#allocation7 + $0x8] sm:$0xf]
    %v1587 = vld [vmem:[#allocation7 + $0xc] sm:$0xf]
    %v1588 = vld [vmem:[#allocation7 + $0x10] sm:$0xf]
    %v1589 = vld [vmem:[#allocation7 + $0x14] sm:$0xf]
    %v1590 = vld [vmem:[#allocation7 + $0x18] sm:$0xf]
    %v1591 = vld [vmem:[#allocation7 + $0x1c] sm:$0xf]
    %v1592 = vld [vmem:[#allocation7 + $0x20] sm:$0xf]
    %v1593 = vld [vmem:[#allocation7 + $0x24] sm:$0xf]
    %v1594 = vld [vmem:[#allocation7 + $0x28] sm:$0xf]
    %v1595 = vld [vmem:[#allocation7 + $0x2c] sm:$0xf]
    %v1596 = vld [vmem:[#allocation7 + $0x30] sm:$0xf]
    %v1597 = vld [vmem:[#allocation7 + $0x34] sm:$0xf]
    %v1598 = vld [vmem:[#allocation7 + $0x38] sm:$0xf]
    %v1599 = vld [vmem:[#allocation7 + $0x3c] sm:$0xf]
    %v1600 = vld [vmem:[#allocation7 + $0x40] sm:$0xf]
    %v1601 = vld [vmem:[#allocation7 + $0x44] sm:$0xf]
    %v1602 = vld [vmem:[#allocation7 + $0x48] sm:$0xf]
    %v1603 = vld [vmem:[#allocation7 + $0x4c] sm:$0xf]
    %v1604 = vld [vmem:[#allocation7 + $0x50] sm:$0xf]
    %v1605 = vld [vmem:[#allocation7 + $0x54] sm:$0xf]
    %v1606 = vld [vmem:[#allocation7 + $0x58] sm:$0xf]
    %v1607 = vld [vmem:[#allocation7 + $0x5c] sm:$0xf]
    %v1608 = vld [vmem:[#allocation7 + $0x60] sm:$0xf]
    %v1609 = vld [vmem:[#allocation7 + $0x64] sm:$0xf]
    %v1610 = vld [vmem:[#allocation7 + $0x68] sm:$0xf]
    %v1611 = vld [vmem:[#allocation7 + $0x6c] sm:$0xf]
    %v1612 = vld [vmem:[#allocation7 + $0x70] sm:$0xf]
    %v1613 = vld [vmem:[#allocation7 + $0x74] sm:$0xf]
    %v1614 = vld [vmem:[#allocation7 + $0x78] sm:$0xf]
    %v1615 = vld [vmem:[#allocation7 + $0x7c] sm:$0xf]
    %v1616 = vld [vmem:[#allocation7 + $0x80] sm:$0xf]
    %v1617 = vld [vmem:[#allocation7 + $0x84] sm:$0xf]
    %v1618 = vld [vmem:[#allocation7 + $0x88] sm:$0xf]
    %v1619 = vld [vmem:[#allocation7 + $0x8c] sm:$0xf]
    %v1620 = vld [vmem:[#allocation7 + $0x90] sm:$0xf]
    %v1621 = vld [vmem:[#allocation7 + $0x94] sm:$0xf]
    %v1622 = vld [vmem:[#allocation7 + $0x98] sm:$0xf]
    %v1623 = vld [vmem:[#allocation7 + $0x9c] sm:$0xf]
    %v1624 = vld [vmem:[#allocation7 + $0xa0] sm:$0xf]
    %v1625 = vld [vmem:[#allocation7 + $0xa4] sm:$0xf]
    %v1626 = vld [vmem:[#allocation7 + $0xa8] sm:$0xf]
    %v1627 = vld [vmem:[#allocation7 + $0xac] sm:$0xf]
    %v1628 = vld [vmem:[#allocation7 + $0xb0] sm:$0xf]
    %v1629 = vld [vmem:[#allocation7 + $0xb4] sm:$0xf]
    %v1630 = vld [vmem:[#allocation7 + $0xb8] sm:$0xf]
    %v1631 = vld [vmem:[#allocation7 + $0xbc] sm:$0xf]
    %v1632 = vld [vmem:[#allocation7 + $0xc0] sm:$0xf]
    %v1633 = vld [vmem:[#allocation7 + $0xc4] sm:$0xf]
    %v1634 = vld [vmem:[#allocation7 + $0xc8] sm:$0xf]
    %v1635 = vld [vmem:[#allocation7 + $0xcc] sm:$0xf]
    %v1636 = vld [vmem:[#allocation7 + $0xd0] sm:$0xf]
    %v1637 = vld [vmem:[#allocation7 + $0xd4] sm:$0xf]
    %v1638 = vld [vmem:[#allocation7 + $0xd8] sm:$0xf]
    %v1639 = vld [vmem:[#allocation7 + $0xdc] sm:$0xf]
    %v1640 = vld [vmem:[#allocation7 + $0xe0] sm:$0xf]
    %v1641 = vld [vmem:[#allocation7 + $0xe4] sm:$0xf]
    %v1642 = vld [vmem:[#allocation7 + $0xe8] sm:$0xf]
    %v1643 = vld [vmem:[#allocation7 + $0xec] sm:$0xf]
    %v1644 = vld [vmem:[#allocation7 + $0xf0] sm:$0xf]
    %v1645 = vld [vmem:[#allocation7 + $0xf4] sm:$0xf]
    %v1646 = vld [vmem:[#allocation7 + $0xf8] sm:$0xf]
    %v1647 = vld [vmem:[#allocation7 + $0xfc] sm:$0xf]
    %v1648 = vld [vmem:[%s5] sm:$0x1]
    %v1650 = vperm.slane %v1648, 0
    %v1716 = vunpack.c.l.b16 %v1584
    %v1717 = vunpack.c.l.b16 %v1585
    %v1718 = vunpack.c.l.b16 %v1586
    %v1719 = vunpack.c.l.b16 %v1587
    %v1720 = vunpack.c.l.b16 %v1588
    %v1721 = vunpack.c.l.b16 %v1589
    %v1722 = vunpack.c.l.b16 %v1590
    %v1723 = vunpack.c.l.b16 %v1591
    %v1724 = vunpack.c.l.b16 %v1592
    %v1725 = vunpack.c.l.b16 %v1593
    %v1726 = vunpack.c.l.b16 %v1594
    %v1727 = vunpack.c.l.b16 %v1595
    %v1728 = vunpack.c.l.b16 %v1596
    %v1729 = vunpack.c.l.b16 %v1597
    %v1730 = vunpack.c.l.b16 %v1598
    %v1731 = vunpack.c.l.b16 %v1599
    %v1732 = vunpack.c.l.b16 %v1600
    %v1733 = vunpack.c.l.b16 %v1601
    %v1734 = vunpack.c.l.b16 %v1602
    %v1735 = vunpack.c.l.b16 %v1603
    %v1736 = vunpack.c.l.b16 %v1604
    %v1737 = vunpack.c.l.b16 %v1605
    %v1738 = vunpack.c.l.b16 %v1606
    %v1739 = vunpack.c.l.b16 %v1607
    %v1740 = vunpack.c.l.b16 %v1608
    %v1741 = vunpack.c.l.b16 %v1609
    %v1742 = vunpack.c.l.b16 %v1610
    %v1743 = vunpack.c.l.b16 %v1611
    %v1744 = vunpack.c.l.b16 %v1612
    %v1745 = vunpack.c.l.b16 %v1613
    %v1746 = vunpack.c.l.b16 %v1614
    %v1747 = vunpack.c.l.b16 %v1615
    %v1748 = vunpack.c.l.b16 %v1616
    %v1749 = vunpack.c.l.b16 %v1617
    %v1750 = vunpack.c.l.b16 %v1618
    %v1751 = vunpack.c.l.b16 %v1619
    %v1752 = vunpack.c.l.b16 %v1620
    %v1753 = vunpack.c.l.b16 %v1621
    %v1754 = vunpack.c.l.b16 %v1622
    %v1755 = vunpack.c.l.b16 %v1623
    %v1756 = vunpack.c.l.b16 %v1624
    %v1757 = vunpack.c.l.b16 %v1625
    %v1758 = vunpack.c.l.b16 %v1626
    %v1759 = vunpack.c.l.b16 %v1627
    %v1760 = vunpack.c.l.b16 %v1628
    %v1761 = vunpack.c.l.b16 %v1629
    %v1762 = vunpack.c.l.b16 %v1630
    %v1763 = vunpack.c.l.b16 %v1631
    %v1764 = vunpack.c.l.b16 %v1632
    %v1765 = vunpack.c.l.b16 %v1633
    %v1766 = vunpack.c.l.b16 %v1634
    %v1767 = vunpack.c.l.b16 %v1635
    %v1768 = vunpack.c.l.b16 %v1636
    %v1769 = vunpack.c.l.b16 %v1637
    %v1770 = vunpack.c.l.b16 %v1638
    %v1771 = vunpack.c.l.b16 %v1639
    %v1772 = vunpack.c.l.b16 %v1640
    %v1773 = vunpack.c.l.b16 %v1641
    %v1774 = vunpack.c.l.b16 %v1642
    %v1775 = vunpack.c.l.b16 %v1643
    %v1776 = vunpack.c.l.b16 %v1644
    %v1777 = vunpack.c.l.b16 %v1645
    %v1778 = vunpack.c.l.b16 %v1646
    %v1779 = vunpack.c.l.b16 %v1647
    %v1780 = vpack.c.b16 %v1717, %v1716
    %v1781 = vpack.c.b16 %v1719, %v1718
    %v1782 = vpack.c.b16 %v1721, %v1720
    %v1783 = vpack.c.b16 %v1723, %v1722
    %v1784 = vpack.c.b16 %v1725, %v1724
    %v1785 = vpack.c.b16 %v1727, %v1726
    %v1786 = vpack.c.b16 %v1729, %v1728
    %v1787 = vpack.c.b16 %v1731, %v1730
    %v1788 = vpack.c.b16 %v1733, %v1732
    %v1789 = vpack.c.b16 %v1735, %v1734
    %v1790 = vpack.c.b16 %v1737, %v1736
    %v1791 = vpack.c.b16 %v1739, %v1738
    %v1792 = vpack.c.b16 %v1741, %v1740
    %v1793 = vpack.c.b16 %v1743, %v1742
    %v1794 = vpack.c.b16 %v1745, %v1744
    %v1795 = vpack.c.b16 %v1747, %v1746
    %v1796 = vpack.c.b16 %v1749, %v1748
    %v1797 = vpack.c.b16 %v1751, %v1750
    %v1798 = vpack.c.b16 %v1753, %v1752
    %v1799 = vpack.c.b16 %v1755, %v1754
    %v1800 = vpack.c.b16 %v1757, %v1756
    %v1801 = vpack.c.b16 %v1759, %v1758
    %v1802 = vpack.c.b16 %v1761, %v1760
    %v1803 = vpack.c.b16 %v1763, %v1762
    %v1804 = vpack.c.b16 %v1765, %v1764
    %v1805 = vpack.c.b16 %v1767, %v1766
    %v1806 = vpack.c.b16 %v1769, %v1768
    %v1807 = vpack.c.b16 %v1771, %v1770
    %v1808 = vpack.c.b16 %v1773, %v1772
    %v1809 = vpack.c.b16 %v1775, %v1774
    %v1810 = vpack.c.b16 %v1777, %v1776
    %v1811 = vpack.c.b16 %v1779, %v1778
    %1844 = vmatpush.bf16.msra.mxu0 %v1787
    %1845 = vmatpush.bf16.msra.mxu0 %v1786
    %1846 = vmatpush.bf16.msra.mxu0 %v1785
    %1847 = vmatpush.bf16.msra.mxu0 %v1784
    %1848 = vmatpush.bf16.msra.mxu0 %v1783
    %1849 = vmatpush.bf16.msra.mxu0 %v1782
    %1850 = vmatpush.bf16.msra.mxu0 %v1781
    %1851 = vmatpush.bf16.msra.mxu0 %v1780
    %1852 = vmatmul.bf16.gmra.mxu0 %v1580
    %v1853 = vpop.f32.mrf.mxu0
    %v1854 = vadd.f32 %v1650, %v1853
    %v1855 = vpop.f32.mrf.mxu0
    %1856 = vdwg.mxu0
    %1857 = vmatpush.bf16.msra.mxu0 %v1795
    %1858 = vmatpush.bf16.msra.mxu0 %v1794
    %1859 = vmatpush.bf16.msra.mxu0 %v1793
    %1860 = vmatpush.bf16.msra.mxu0 %v1792
    %1861 = vmatpush.bf16.msra.mxu0 %v1791
    %1862 = vmatpush.bf16.msra.mxu0 %v1790
    %1863 = vmatpush.bf16.msra.mxu0 %v1789
    %1864 = vmatpush.bf16.msra.mxu0 %v1788
    %1865 = vmatmul.bf16.gmra.mxu0 %v1581
    %v1866 = vpop.f32.mrf.mxu0
    %v1867 = vadd.f32 %v1854, %v1866
    %v1868 = vpop.f32.mrf.mxu0
    %1869 = vdwg.mxu0
    %1870 = vmatpush.bf16.msra.mxu0 %v1803
    %1871 = vmatpush.bf16.msra.mxu0 %v1802
    %1872 = vmatpush.bf16.msra.mxu0 %v1801
    %1873 = vmatpush.bf16.msra.mxu0 %v1800
    %1874 = vmatpush.bf16.msra.mxu0 %v1799
    %1875 = vmatpush.bf16.msra.mxu0 %v1798
    %1876 = vmatpush.bf16.msra.mxu0 %v1797
    %1877 = vmatpush.bf16.msra.mxu0 %v1796
    %1878 = vmatmul.bf16.gmra.mxu0 %v1582
    %v1879 = vpop.f32.mrf.mxu0
    %v1880 = vadd.f32 %v1867, %v1879
    %v1881 = vpop.f32.mrf.mxu0
    %1882 = vdwg.mxu0
    %1883 = vmatpush.bf16.msra.mxu0 %v1811
    %1884 = vmatpush.bf16.msra.mxu0 %v1810
    %1885 = vmatpush.bf16.msra.mxu0 %v1809
    %1886 = vmatpush.bf16.msra.mxu0 %v1808
    %1887 = vmatpush.bf16.msra.mxu0 %v1807
    %1888 = vmatpush.bf16.msra.mxu0 %v1806
    %1889 = vmatpush.bf16.msra.mxu0 %v1805
    %1890 = vmatpush.bf16.msra.mxu0 %v1804
    %1891 = vmatmul.bf16.gmra.mxu0 %v1583
    %v1892 = vpop.f32.mrf.mxu0
    %v1893 = vadd.f32 %v1880, %v1892
    %v1894 = vpop.f32.mrf.mxu0
    %1895 = vdwg.mxu0
    %v1896 = vpack.c.bf16 %v1893, %v1893
    %1897 = vst [vmem:[#allocation8] sm:$0xf] %v1896
    // Predicated region
    $region38: #{tpu_custom_call.1} parent=1 // pred_check
      _
    $region39: #{tpu_custom_call.1} parent=1 // pred_check_branch
      %1899 = sbr.rel (0) target = $region41
    $region40: #{tpu_custom_call.1} parent=1 // pred_region
      %1901 = vsyncadd [#allocation4], 0
      %s1903 = sshll.u32 [#allocation8], 4
      %s1904 = int_to_ptr.vmem [resolvable:$true] %s1903
      %s1905 = sshll.u32 %s6, 4
      %s1906 = int_to_ptr.hbm [resolvable:$true] %s1905
      %1908 = dma.vmem_to_hbm [thread:$0]  %s1904, 64, %s1906, [#allocation4]
    $region41: #{tpu_custom_call.1} parent=1 // pred_fallthru
      _
    // Predicated region
    $region42: #{tpu_custom_call.1} parent=1 // pred_check
      _
    $region43: #{tpu_custom_call.1} parent=1 // pred_check_branch
      %1910 = sbr.rel (0) target = $region45
    $region44: #{tpu_custom_call.1} parent=1 // pred_region
      %1912 = dma.done [#allocation4], 64
    $region45: #{tpu_custom_call.1} parent=1 // pred_fallthru
      _
    %1913 = vsyncpa [#allocation3], 1
    %1914 = vsyncpa [#allocation6], 1
    %1915 = vsyncpa [#allocation4], 1

</llo_original>
